<compile_context>
chip_gen: v6e
topology: v6e:2x2x1
jax: 0.10.0
libtpu: 0.0.40
codegen_flags: <defaults>
</compile_context>

<pallas_src>
import functools

import jax
import jax.numpy as jnp
from jax.experimental import pallas as pl
from jax.experimental.pallas import tpu as pltpu


# ---------------------------------------------------------------------------
# Kernel A: 3x3 stride-2 conv + bias (+ per-channel partial sums for BN).
# ---------------------------------------------------------------------------
def _conv_bias_kernel(xp_ref, w_ref, b_ref, y_ref, s_ref, q_ref):
    # xp_ref: (1, 4, Hh, Wh, Cin)   phase-split padded input for one image
    # w_ref : (9, Cin, Cout)        taps in kh*3+kw order
    # b_ref : (1, Cout)
    # y_ref : (1, Ho, Wo, Cout)
    # s_ref, q_ref: (1, 1, Cout)    per-image channel sum / sum of squares
    _, Ho, Wo, Co = y_ref.shape
    Ci = xp_ref.shape[-1]

    acc = jnp.zeros((Ho * Wo, Co), dtype=jnp.float32)
    for kh in range(3):
        for kw in range(3):
            ph = (kh % 2) * 2 + (kw % 2)
            patch = xp_ref[0, ph, pl.ds(kh // 2, Ho), pl.ds(kw // 2, Wo), :]
            acc = acc + jnp.dot(
                patch.reshape(Ho * Wo, Ci),
                w_ref[kh * 3 + kw],
                preferred_element_type=jnp.float32,
            )
    acc = acc + b_ref[...]                      # (1, Co) broadcast over rows

    y_ref[...] = acc.reshape(1, Ho, Wo, Co)
    s_ref[...] = jnp.sum(acc, axis=0, keepdims=True).reshape(1, 1, Co)
    q_ref[...] = jnp.sum(acc * acc, axis=0, keepdims=True).reshape(1, 1, Co)


# ---------------------------------------------------------------------------
# Kernel B: fused BatchNorm apply (per-channel scale/shift) + LeakyReLU(0.2).
# ---------------------------------------------------------------------------
def _bn_lrelu_kernel(y_ref, scale_ref, shift_ref, o_ref, *, negative_slope):
    y = y_ref[...]                               # (1, Ho, Wo, C)
    s = scale_ref[...].reshape(1, 1, 1, -1)      # (1, 1, 1, C)
    t = shift_ref[...].reshape(1, 1, 1, -1)
    z = y * s + t
    o_ref[...] = jnp.where(z > 0, z, negative_slope * z)


# ---------------------------------------------------------------------------
# Wrapper
# ---------------------------------------------------------------------------
def group8_forward(x_nchw, conv_w, conv_b, bn_gamma, bn_beta,
                   *, eps=1e-5, negative_slope=0.2):
    orig_dtype = x_nchw.dtype
    x = x_nchw.astype(jnp.float32)
    N, Ci, H, W = x.shape
    Co = conv_w.shape[0]
    stride, k = 2, 3

    # TF-"SAME" output size / padding (matches the custom Conv2d in Unet.py).
    Ho = -(-H // stride)
    Wo = -(-W // stride)
    pad_h = max((Ho - 1) * stride + k - H, 0)
    pad_w = max((Wo - 1) * stride + k - W, 0)
    pad_t, pad_l = pad_h // 2, pad_w // 2

    # NHWC: channels (=128) become the lane dimension.
    x_nhwc = jnp.transpose(x, (0, 2, 3, 1))

    # Pad so each even/odd phase has Hh = Ho + 1 rows (extra zero rows beyond
    # SAME padding are never read by valid taps).
    Hh, Wh = Ho + 1, Wo + 1
    pad_b = 2 * Hh - H - pad_t
    pad_r = 2 * Wh - W - pad_l
    x_pad = jnp.pad(x_nhwc, ((0, 0), (pad_t, pad_b), (pad_l, pad_r), (0, 0)))

    # Space-to-depth: x_ph[n, 2*p + q, i, j, c] == x_pad[n, 2*i + p, 2*j + q, c]
    x_ph = (
        x_pad.reshape(N, Hh, 2, Wh, 2, Ci)
        .transpose(0, 2, 4, 1, 3, 5)
        .reshape(N, 4, Hh, Wh, Ci)
    )

    # PyTorch (O, I, kh, kw) -> (kh*3+kw, I, O); bias -> (1, O).
    w_r = jnp.transpose(conv_w.astype(jnp.float32), (2, 3, 1, 0)).reshape(9, Ci, Co)
    b_r = conv_b.astype(jnp.float32).reshape(1, Co)

    y, s_sum, q_sum = pl.pallas_call(
        _conv_bias_kernel,
        out_shape=(
            jax.ShapeDtypeStruct((N, Ho, Wo, Co), jnp.float32),
            jax.ShapeDtypeStruct((N, 1, Co), jnp.float32),
            jax.ShapeDtypeStruct((N, 1, Co), jnp.float32),
        ),
        grid_spec=pltpu.PrefetchScalarGridSpec(
            num_scalar_prefetch=0,
            grid=(N,),
            in_specs=[
                pl.BlockSpec((1, 4, Hh, Wh, Ci), lambda n: (n, 0, 0, 0, 0)),
                pl.BlockSpec((9, Ci, Co), lambda n: (0, 0, 0)),
                pl.BlockSpec((1, Co), lambda n: (0, 0)),
            ],
            out_specs=[
                pl.BlockSpec((1, Ho, Wo, Co), lambda n: (n, 0, 0, 0)),
                pl.BlockSpec((1, 1, Co), lambda n: (n, 0, 0)),
                pl.BlockSpec((1, 1, Co), lambda n: (n, 0, 0)),
            ],
        ),
        compiler_params=pltpu.CompilerParams(
            dimension_semantics=("parallel",)),
    )(x_ph, w_r, b_r)

    # Training-mode BatchNorm statistics (biased variance) from the tiny
    # per-image partial sums emitted by kernel A.
    count = N * Ho * Wo
    mean = jnp.sum(s_sum, axis=(0, 1)) / count
    mean_sq = jnp.sum(q_sum, axis=(0, 1)) / count
    var = jnp.maximum(mean_sq - mean * mean, 0.0)
    inv_std = jax.lax.rsqrt(var + eps)
    g = bn_gamma.astype(jnp.float32)
    scale = (g * inv_std).reshape(1, Co)
    shift = (bn_beta.astype(jnp.float32) - mean * g * inv_std).reshape(1, Co)

    out_nhwc = pl.pallas_call(
        functools.partial(_bn_lrelu_kernel, negative_slope=negative_slope),
        out_shape=jax.ShapeDtypeStruct((N, Ho, Wo, Co), jnp.float32),
        grid_spec=pltpu.PrefetchScalarGridSpec(
            num_scalar_prefetch=0,
            grid=(N,),
            in_specs=[
                pl.BlockSpec((1, Ho, Wo, Co), lambda n: (n, 0, 0, 0)),
                pl.BlockSpec((1, Co), lambda n: (0, 0)),
                pl.BlockSpec((1, Co), lambda n: (0, 0)),
            ],
            out_specs=pl.BlockSpec((1, Ho, Wo, Co), lambda n: (n, 0, 0, 0)),
        ),
        compiler_params=pltpu.CompilerParams(
            dimension_semantics=("parallel",)),
    )(y, scale, shift)

    return jnp.transpose(out_nhwc, (0, 3, 1, 2)).astype(orig_dtype)


# ---------------------------------------------------------------------------
# Pure-JAX reference (same semantics as the PyTorch module in training mode).
# ---------------------------------------------------------------------------
def _reference(x, conv_w, conv_b, gamma, beta, eps=1e-5, negative_slope=0.2):
    N, Ci, H, W = x.shape
    Ho, Wo = -(-H // 2), -(-W // 2)
    pad_h = max((Ho - 1) * 2 + 3 - H, 0)
    pad_w = max((Wo - 1) * 2 + 3 - W, 0)
    pad = ((pad_h // 2, pad_h - pad_h // 2), (pad_w // 2, pad_w - pad_w // 2))
    y = jax.lax.conv_general_dilated(
        x, conv_w, window_strides=(2, 2), padding=pad,
        dimension_numbers=("NCHW", "OIHW", "NCHW"),
        precision=jax.lax.Precision.HIGHEST,
    ) + conv_b.reshape(1, -1, 1, 1)
    mu = jnp.mean(y, axis=(0, 2, 3), keepdims=True)
    var = jnp.mean((y - mu) ** 2, axis=(0, 2, 3), keepdims=True)
    z = gamma.reshape(1, -1, 1, 1) * (y - mu) / jnp.sqrt(var + eps) \
        + beta.reshape(1, -1, 1, 1)
    return jnp.where(z > 0, z, negative_slope * z)


if __name__ == "__main__":
    key = jax.random.PRNGKey(0)
    k1, k2, k3, k4, k5 = jax.random.split(key, 5)
    # Module fixes channels at 128; keep batch/spatial small.
    x = jax.random.normal(k1, (2, 128, 16, 16), dtype=jnp.float32)
    conv_w = jax.random.normal(k2, (128, 128, 3, 3), dtype=jnp.float32) * 0.05
    conv_b = jax.random.normal(k3, (128,), dtype=jnp.float32) * 0.1
    gamma = 1.0 + 0.1 * jax.random.normal(k4, (128,), dtype=jnp.float32)
    beta = 0.1 * jax.random.normal(k5, (128,), dtype=jnp.float32)

    out = jax.jit(group8_forward)(x, conv_w, conv_b, gamma, beta)
    out = jax.block_until_ready(out)

    ref = _reference(x, conv_w, conv_b, gamma, beta)
    assert out.shape == ref.shape == (2, 128, 8, 8), (out.shape, ref.shape)
    max_err = float(jnp.max(jnp.abs(out - ref)))
    assert jnp.allclose(out, ref, atol=2e-2, rtol=2e-2), f"mismatch, max_err={max_err}"

    print("KERNEL_OK")
</pallas_src>

<mosaic_0001>
module attributes {stable_mosaic.version = 11 : i64} {
  func.func @_conv_bias_kernel(%arg0: i32, %arg1: memref<1x4x9x9x128xf32, #tpu.memory_space<vmem>>, %arg2: memref<9x128x128xf32, #tpu.memory_space<vmem>>, %arg3: memref<1x128xf32, #tpu.memory_space<vmem>>, %arg4: memref<1x8x8x128xf32, #tpu.memory_space<vmem>>, %arg5: memref<1x1x128xf32, #tpu.memory_space<vmem>>, %arg6: memref<1x1x128xf32, #tpu.memory_space<vmem>>) attributes {dimension_semantics = [#tpu.dimension_semantics<parallel>], iteration_bounds = array<i64: 2>, scalar_prefetch = 0 : i64, scratch_operands = 0 : i64, tpu.core_type = #tpu.core_type<tc>, window_params = [{transform_indices = @transform_0, window_bounds = array<i64: 1, 4, 9, 9, 128>}, {pipeline_mode = #tpu.pipeline_mode<synchronous>, transform_indices = @transform_1, window_bounds = array<i64: 9, 128, 128>}, {pipeline_mode = #tpu.pipeline_mode<synchronous>, transform_indices = @transform_2, window_bounds = array<i64: 1, 128>}, {transform_indices = @transform_3, window_bounds = array<i64: 1, 8, 8, 128>}, {transform_indices = @transform_4, window_bounds = array<i64: 1, 1, 128>}, {transform_indices = @transform_5, window_bounds = array<i64: 1, 1, 128>}]} {
    %cst = arith.constant 0.000000e+00 : f32
    %0 = vector.broadcast %cst : f32 to vector<64x128xf32>
    %c0 = arith.constant 0 : index
    %c0_0 = arith.constant 0 : index
    %c0_1 = arith.constant 0 : index
    %c0_2 = arith.constant 0 : index
    %c0_3 = arith.constant 0 : index
    %1 = vector.load %arg1[%c0, %c0_0, %c0_1, %c0_2, %c0_3] : memref<1x4x9x9x128xf32, #tpu.memory_space<vmem>>, vector<1x1x8x8x128xf32>
    %2 = vector.shape_cast %1 : vector<1x1x8x8x128xf32> to vector<8x8x128xf32>
    %3 = vector.shape_cast %2 : vector<8x8x128xf32> to vector<64x128xf32>
    %c0_4 = arith.constant 0 : index
    %c0_5 = arith.constant 0 : index
    %c0_6 = arith.constant 0 : index
    %4 = vector.load %arg2[%c0_4, %c0_5, %c0_6] : memref<9x128x128xf32, #tpu.memory_space<vmem>>, vector<1x128x128xf32>
    %5 = vector.shape_cast %4 : vector<1x128x128xf32> to vector<128x128xf32>
    %cst_7 = arith.constant dense<0.000000e+00> : vector<64x128xf32>
    %6 = tpu.matmul %3, %5, %cst_7 {dimension_numbers = #tpu.dot_dimension_numbers<[1], [0], [0], [1], [0, 0, 1, 1], [], []>} : vector<64x128xf32>, vector<128x128xf32>, vector<64x128xf32> -> vector<64x128xf32>
    %7 = arith.addf %0, %6 : vector<64x128xf32>
    %c0_8 = arith.constant 0 : index
    %c1 = arith.constant 1 : index
    %c0_9 = arith.constant 0 : index
    %c0_10 = arith.constant 0 : index
    %c0_11 = arith.constant 0 : index
    %8 = vector.load %arg1[%c0_8, %c1, %c0_9, %c0_10, %c0_11] : memref<1x4x9x9x128xf32, #tpu.memory_space<vmem>>, vector<1x1x8x8x128xf32>
    %9 = vector.shape_cast %8 : vector<1x1x8x8x128xf32> to vector<8x8x128xf32>
    %10 = vector.shape_cast %9 : vector<8x8x128xf32> to vector<64x128xf32>
    %c1_12 = arith.constant 1 : index
    %c0_13 = arith.constant 0 : index
    %c0_14 = arith.constant 0 : index
    %11 = vector.load %arg2[%c1_12, %c0_13, %c0_14] : memref<9x128x128xf32, #tpu.memory_space<vmem>>, vector<1x128x128xf32>
    %12 = vector.shape_cast %11 : vector<1x128x128xf32> to vector<128x128xf32>
    %cst_15 = arith.constant dense<0.000000e+00> : vector<64x128xf32>
    %13 = tpu.matmul %10, %12, %cst_15 {dimension_numbers = #tpu.dot_dimension_numbers<[1], [0], [0], [1], [0, 0, 1, 1], [], []>} : vector<64x128xf32>, vector<128x128xf32>, vector<64x128xf32> -> vector<64x128xf32>
    %14 = arith.addf %7, %13 : vector<64x128xf32>
    %c0_16 = arith.constant 0 : index
    %c0_17 = arith.constant 0 : index
    %c0_18 = arith.constant 0 : index
    %c1_19 = arith.constant 1 : index
    %c0_20 = arith.constant 0 : index
    %15 = vector.load %arg1[%c0_16, %c0_17, %c0_18, %c1_19, %c0_20] : memref<1x4x9x9x128xf32, #tpu.memory_space<vmem>>, vector<1x1x8x8x128xf32>
    %16 = vector.shape_cast %15 : vector<1x1x8x8x128xf32> to vector<8x8x128xf32>
    %17 = vector.shape_cast %16 : vector<8x8x128xf32> to vector<64x128xf32>
    %c2 = arith.constant 2 : index
    %c0_21 = arith.constant 0 : index
    %c0_22 = arith.constant 0 : index
    %18 = vector.load %arg2[%c2, %c0_21, %c0_22] : memref<9x128x128xf32, #tpu.memory_space<vmem>>, vector<1x128x128xf32>
    %19 = vector.shape_cast %18 : vector<1x128x128xf32> to vector<128x128xf32>
    %cst_23 = arith.constant dense<0.000000e+00> : vector<64x128xf32>
    %20 = tpu.matmul %17, %19, %cst_23 {dimension_numbers = #tpu.dot_dimension_numbers<[1], [0], [0], [1], [0, 0, 1, 1], [], []>} : vector<64x128xf32>, vector<128x128xf32>, vector<64x128xf32> -> vector<64x128xf32>
    %21 = arith.addf %14, %20 : vector<64x128xf32>
    %c0_24 = arith.constant 0 : index
    %c2_25 = arith.constant 2 : index
    %c0_26 = arith.constant 0 : index
    %c0_27 = arith.constant 0 : index
    %c0_28 = arith.constant 0 : index
    %22 = vector.load %arg1[%c0_24, %c2_25, %c0_26, %c0_27, %c0_28] : memref<1x4x9x9x128xf32, #tpu.memory_space<vmem>>, vector<1x1x8x8x128xf32>
    %23 = vector.shape_cast %22 : vector<1x1x8x8x128xf32> to vector<8x8x128xf32>
    %24 = vector.shape_cast %23 : vector<8x8x128xf32> to vector<64x128xf32>
    %c3 = arith.constant 3 : index
    %c0_29 = arith.constant 0 : index
    %c0_30 = arith.constant 0 : index
    %25 = vector.load %arg2[%c3, %c0_29, %c0_30] : memref<9x128x128xf32, #tpu.memory_space<vmem>>, vector<1x128x128xf32>
    %26 = vector.shape_cast %25 : vector<1x128x128xf32> to vector<128x128xf32>
    %cst_31 = arith.constant dense<0.000000e+00> : vector<64x128xf32>
    %27 = tpu.matmul %24, %26, %cst_31 {dimension_numbers = #tpu.dot_dimension_numbers<[1], [0], [0], [1], [0, 0, 1, 1], [], []>} : vector<64x128xf32>, vector<128x128xf32>, vector<64x128xf32> -> vector<64x128xf32>
    %28 = arith.addf %21, %27 : vector<64x128xf32>
    %c0_32 = arith.constant 0 : index
    %c3_33 = arith.constant 3 : index
    %c0_34 = arith.constant 0 : index
    %c0_35 = arith.constant 0 : index
    %c0_36 = arith.constant 0 : index
    %29 = vector.load %arg1[%c0_32, %c3_33, %c0_34, %c0_35, %c0_36] : memref<1x4x9x9x128xf32, #tpu.memory_space<vmem>>, vector<1x1x8x8x128xf32>
    %30 = vector.shape_cast %29 : vector<1x1x8x8x128xf32> to vector<8x8x128xf32>
    %31 = vector.shape_cast %30 : vector<8x8x128xf32> to vector<64x128xf32>
    %c4 = arith.constant 4 : index
    %c0_37 = arith.constant 0 : index
    %c0_38 = arith.constant 0 : index
    %32 = vector.load %arg2[%c4, %c0_37, %c0_38] : memref<9x128x128xf32, #tpu.memory_space<vmem>>, vector<1x128x128xf32>
    %33 = vector.shape_cast %32 : vector<1x128x128xf32> to vector<128x128xf32>
    %cst_39 = arith.constant dense<0.000000e+00> : vector<64x128xf32>
    %34 = tpu.matmul %31, %33, %cst_39 {dimension_numbers = #tpu.dot_dimension_numbers<[1], [0], [0], [1], [0, 0, 1, 1], [], []>} : vector<64x128xf32>, vector<128x128xf32>, vector<64x128xf32> -> vector<64x128xf32>
    %35 = arith.addf %28, %34 : vector<64x128xf32>
    %c0_40 = arith.constant 0 : index
    %c2_41 = arith.constant 2 : index
    %c0_42 = arith.constant 0 : index
    %c1_43 = arith.constant 1 : index
    %c0_44 = arith.constant 0 : index
    %36 = vector.load %arg1[%c0_40, %c2_41, %c0_42, %c1_43, %c0_44] : memref<1x4x9x9x128xf32, #tpu.memory_space<vmem>>, vector<1x1x8x8x128xf32>
    %37 = vector.shape_cast %36 : vector<1x1x8x8x128xf32> to vector<8x8x128xf32>
    %38 = vector.shape_cast %37 : vector<8x8x128xf32> to vector<64x128xf32>
    %c5 = arith.constant 5 : index
    %c0_45 = arith.constant 0 : index
    %c0_46 = arith.constant 0 : index
    %39 = vector.load %arg2[%c5, %c0_45, %c0_46] : memref<9x128x128xf32, #tpu.memory_space<vmem>>, vector<1x128x128xf32>
    %40 = vector.shape_cast %39 : vector<1x128x128xf32> to vector<128x128xf32>
    %cst_47 = arith.constant dense<0.000000e+00> : vector<64x128xf32>
    %41 = tpu.matmul %38, %40, %cst_47 {dimension_numbers = #tpu.dot_dimension_numbers<[1], [0], [0], [1], [0, 0, 1, 1], [], []>} : vector<64x128xf32>, vector<128x128xf32>, vector<64x128xf32> -> vector<64x128xf32>
    %42 = arith.addf %35, %41 : vector<64x128xf32>
    %c0_48 = arith.constant 0 : index
    %c0_49 = arith.constant 0 : index
    %c1_50 = arith.constant 1 : index
    %c0_51 = arith.constant 0 : index
    %c0_52 = arith.constant 0 : index
    %43 = vector.load %arg1[%c0_48, %c0_49, %c1_50, %c0_51, %c0_52] : memref<1x4x9x9x128xf32, #tpu.memory_space<vmem>>, vector<1x1x8x8x128xf32>
    %44 = vector.shape_cast %43 : vector<1x1x8x8x128xf32> to vector<8x8x128xf32>
    %45 = vector.shape_cast %44 : vector<8x8x128xf32> to vector<64x128xf32>
    %c6 = arith.constant 6 : index
    %c0_53 = arith.constant 0 : index
    %c0_54 = arith.constant 0 : index
    %46 = vector.load %arg2[%c6, %c0_53, %c0_54] : memref<9x128x128xf32, #tpu.memory_space<vmem>>, vector<1x128x128xf32>
    %47 = vector.shape_cast %46 : vector<1x128x128xf32> to vector<128x128xf32>
    %cst_55 = arith.constant dense<0.000000e+00> : vector<64x128xf32>
    %48 = tpu.matmul %45, %47, %cst_55 {dimension_numbers = #tpu.dot_dimension_numbers<[1], [0], [0], [1], [0, 0, 1, 1], [], []>} : vector<64x128xf32>, vector<128x128xf32>, vector<64x128xf32> -> vector<64x128xf32>
    %49 = arith.addf %42, %48 : vector<64x128xf32>
    %c0_56 = arith.constant 0 : index
    %c1_57 = arith.constant 1 : index
    %c1_58 = arith.constant 1 : index
    %c0_59 = arith.constant 0 : index
    %c0_60 = arith.constant 0 : index
    %50 = vector.load %arg1[%c0_56, %c1_57, %c1_58, %c0_59, %c0_60] : memref<1x4x9x9x128xf32, #tpu.memory_space<vmem>>, vector<1x1x8x8x128xf32>
    %51 = vector.shape_cast %50 : vector<1x1x8x8x128xf32> to vector<8x8x128xf32>
    %52 = vector.shape_cast %51 : vector<8x8x128xf32> to vector<64x128xf32>
    %c7 = arith.constant 7 : index
    %c0_61 = arith.constant 0 : index
    %c0_62 = arith.constant 0 : index
    %53 = vector.load %arg2[%c7, %c0_61, %c0_62] : memref<9x128x128xf32, #tpu.memory_space<vmem>>, vector<1x128x128xf32>
    %54 = vector.shape_cast %53 : vector<1x128x128xf32> to vector<128x128xf32>
    %cst_63 = arith.constant dense<0.000000e+00> : vector<64x128xf32>
    %55 = tpu.matmul %52, %54, %cst_63 {dimension_numbers = #tpu.dot_dimension_numbers<[1], [0], [0], [1], [0, 0, 1, 1], [], []>} : vector<64x128xf32>, vector<128x128xf32>, vector<64x128xf32> -> vector<64x128xf32>
    %56 = arith.addf %49, %55 : vector<64x128xf32>
    %c0_64 = arith.constant 0 : index
    %c0_65 = arith.constant 0 : index
    %c1_66 = arith.constant 1 : index
    %c1_67 = arith.constant 1 : index
    %c0_68 = arith.constant 0 : index
    %57 = vector.load %arg1[%c0_64, %c0_65, %c1_66, %c1_67, %c0_68] : memref<1x4x9x9x128xf32, #tpu.memory_space<vmem>>, vector<1x1x8x8x128xf32>
    %58 = vector.shape_cast %57 : vector<1x1x8x8x128xf32> to vector<8x8x128xf32>
    %59 = vector.shape_cast %58 : vector<8x8x128xf32> to vector<64x128xf32>
    %c8 = arith.constant 8 : index
    %c0_69 = arith.constant 0 : index
    %c0_70 = arith.constant 0 : index
    %60 = vector.load %arg2[%c8, %c0_69, %c0_70] : memref<9x128x128xf32, #tpu.memory_space<vmem>>, vector<1x128x128xf32>
    %61 = vector.shape_cast %60 : vector<1x128x128xf32> to vector<128x128xf32>
    %cst_71 = arith.constant dense<0.000000e+00> : vector<64x128xf32>
    %62 = tpu.matmul %59, %61, %cst_71 {dimension_numbers = #tpu.dot_dimension_numbers<[1], [0], [0], [1], [0, 0, 1, 1], [], []>} : vector<64x128xf32>, vector<128x128xf32>, vector<64x128xf32> -> vector<64x128xf32>
    %63 = arith.addf %56, %62 : vector<64x128xf32>
    %c0_72 = arith.constant 0 : index
    %c0_73 = arith.constant 0 : index
    %64 = vector.load %arg3[%c0_72, %c0_73] : memref<1x128xf32, #tpu.memory_space<vmem>>, vector<1x128xf32>
    %65 = vector.broadcast %64 : vector<1x128xf32> to vector<64x128xf32>
    %66 = arith.addf %63, %65 : vector<64x128xf32>
    %67 = vector.shape_cast %66 : vector<64x128xf32> to vector<1x8x8x128xf32>
    %c0_74 = arith.constant 0 : index
    %c0_75 = arith.constant 0 : index
    %c0_76 = arith.constant 0 : index
    %c0_77 = arith.constant 0 : index
    %68 = vector.load %arg4[%c0_74, %c0_75, %c0_76, %c0_77] : memref<1x8x8x128xf32, #tpu.memory_space<vmem>>, vector<1x8x8x128xf32>
    tpu.vector_store %arg4[%c0_74, %c0_75, %c0_76, %c0_77], %67 {strides = array<i32>} : memref<1x8x8x128xf32, #tpu.memory_space<vmem>>, vector<1x8x8x128xf32>,
    %cst_78 = arith.constant dense<0.000000e+00> : vector<128xf32>
    %69 = vector.multi_reduction <add>, %66, %cst_78 [0] : vector<64x128xf32> to vector<128xf32>
    %70 = vector.shape_cast %69 : vector<128xf32> to vector<1x128xf32>
    %71 = vector.shape_cast %70 : vector<1x128xf32> to vector<1x1x128xf32>
    %c0_79 = arith.constant 0 : index
    %c0_80 = arith.constant 0 : index
    %c0_81 = arith.constant 0 : index
    %72 = vector.load %arg5[%c0_79, %c0_80, %c0_81] : memref<1x1x128xf32, #tpu.memory_space<vmem>>, vector<1x1x128xf32>
    tpu.vector_store %arg5[%c0_79, %c0_80, %c0_81], %71 {strides = array<i32>} : memref<1x1x128xf32, #tpu.memory_space<vmem>>, vector<1x1x128xf32>,
    %73 = arith.mulf %66, %66 : vector<64x128xf32>
    %cst_82 = arith.constant dense<0.000000e+00> : vector<128xf32>
    %74 = vector.multi_reduction <add>, %73, %cst_82 [0] : vector<64x128xf32> to vector<128xf32>
    %75 = vector.shape_cast %74 : vector<128xf32> to vector<1x128xf32>
    %76 = vector.shape_cast %75 : vector<1x128xf32> to vector<1x1x128xf32>
    %c0_83 = arith.constant 0 : index
    %c0_84 = arith.constant 0 : index
    %c0_85 = arith.constant 0 : index
    %77 = vector.load %arg6[%c0_83, %c0_84, %c0_85] : memref<1x1x128xf32, #tpu.memory_space<vmem>>, vector<1x1x128xf32>
    tpu.vector_store %arg6[%c0_83, %c0_84, %c0_85], %76 {strides = array<i32>} : memref<1x1x128xf32, #tpu.memory_space<vmem>>, vector<1x1x128xf32>,
    return
  }
  func.func @transform_0(%arg0: i32) -> (i32, i32, i32, i32, i32) {
    %c0_i32 = arith.constant 0 : i32
    %c0_i32_0 = arith.constant 0 : i32
    %c0_i32_1 = arith.constant 0 : i32
    %c0_i32_2 = arith.constant 0 : i32
    %c0_i32_3 = arith.constant 0 : i32
    return %arg0, %c0_i32, %c0_i32_0, %c0_i32_1, %c0_i32_2 : i32, i32, i32, i32, i32
  }
  func.func @transform_1(%arg0: i32) -> (i32, i32, i32) {
    %c0_i32 = arith.constant 0 : i32
    %c0_i32_0 = arith.constant 0 : i32
    %c0_i32_1 = arith.constant 0 : i32
    %c0_i32_2 = arith.constant 0 : i32
    return %c0_i32, %c0_i32_0, %c0_i32_1 : i32, i32, i32
  }
  func.func @transform_2(%arg0: i32) -> (i32, i32) {
    %c0_i32 = arith.constant 0 : i32
    %c0_i32_0 = arith.constant 0 : i32
    %c0_i32_1 = arith.constant 0 : i32
    return %c0_i32, %c0_i32_0 : i32, i32
  }
  func.func @transform_3(%arg0: i32) -> (i32, i32, i32, i32) {
    %c0_i32 = arith.constant 0 : i32
    %c0_i32_0 = arith.constant 0 : i32
    %c0_i32_1 = arith.constant 0 : i32
    %c0_i32_2 = arith.constant 0 : i32
    return %arg0, %c0_i32, %c0_i32_0, %c0_i32_1 : i32, i32, i32, i32
  }
  func.func @transform_4(%arg0: i32) -> (i32, i32, i32) {
    %c0_i32 = arith.constant 0 : i32
    %c0_i32_0 = arith.constant 0 : i32
    %c0_i32_1 = arith.constant 0 : i32
    return %arg0, %c0_i32, %c0_i32_0 : i32, i32, i32
  }
  func.func @transform_5(%arg0: i32) -> (i32, i32, i32) {
    %c0_i32 = arith.constant 0 : i32
    %c0_i32_0 = arith.constant 0 : i32
    %c0_i32_1 = arith.constant 0 : i32
    return %arg0, %c0_i32, %c0_i32_0 : i32, i32, i32
  }
}

module attributes {stable_mosaic.version = 11 : i64} {
  func.func @_bn_lrelu_kernel(%arg0: i32, %arg1: memref<1x8x8x128xf32, #tpu.memory_space<vmem>>, %arg2: memref<1x128xf32, #tpu.memory_space<vmem>>, %arg3: memref<1x128xf32, #tpu.memory_space<vmem>>, %arg4: memref<1x8x8x128xf32, #tpu.memory_space<vmem>>) attributes {dimension_semantics = [#tpu.dimension_semantics<parallel>], iteration_bounds = array<i64: 2>, scalar_prefetch = 0 : i64, scratch_operands = 0 : i64, tpu.core_type = #tpu.core_type<tc>, window_params = [{transform_indices = @transform_0, window_bounds = array<i64: 1, 8, 8, 128>}, {pipeline_mode = #tpu.pipeline_mode<synchronous>, transform_indices = @transform_1, window_bounds = array<i64: 1, 128>}, {pipeline_mode = #tpu.pipeline_mode<synchronous>, transform_indices = @transform_2, window_bounds = array<i64: 1, 128>}, {transform_indices = @transform_3, window_bounds = array<i64: 1, 8, 8, 128>}]} {
    %c0 = arith.constant 0 : index
    %c0_0 = arith.constant 0 : index
    %c0_1 = arith.constant 0 : index
    %c0_2 = arith.constant 0 : index
    %0 = vector.load %arg1[%c0, %c0_0, %c0_1, %c0_2] : memref<1x8x8x128xf32, #tpu.memory_space<vmem>>, vector<1x8x8x128xf32>
    %c0_3 = arith.constant 0 : index
    %c0_4 = arith.constant 0 : index
    %1 = vector.load %arg2[%c0_3, %c0_4] : memref<1x128xf32, #tpu.memory_space<vmem>>, vector<1x128xf32>
    %2 = vector.shape_cast %1 : vector<1x128xf32> to vector<1x1x1x128xf32>
    %c0_5 = arith.constant 0 : index
    %c0_6 = arith.constant 0 : index
    %3 = vector.load %arg3[%c0_5, %c0_6] : memref<1x128xf32, #tpu.memory_space<vmem>>, vector<1x128xf32>
    %4 = vector.shape_cast %3 : vector<1x128xf32> to vector<1x1x1x128xf32>
    %5 = vector.broadcast %2 : vector<1x1x1x128xf32> to vector<1x8x8x128xf32>
    %6 = arith.mulf %0, %5 : vector<1x8x8x128xf32>
    %7 = vector.broadcast %4 : vector<1x1x1x128xf32> to vector<1x8x8x128xf32>
    %8 = arith.addf %6, %7 : vector<1x8x8x128xf32>
    %cst = arith.constant 0.000000e+00 : f32
    %9 = vector.broadcast %cst : f32 to vector<1x8x8x128xf32>
    %10 = arith.cmpf ogt, %8, %9 : vector<1x8x8x128xf32>
    %cst_7 = arith.constant 2.000000e-01 : f32
    %11 = vector.broadcast %cst_7 : f32 to vector<1x8x8x128xf32>
    %12 = arith.mulf %11, %8 : vector<1x8x8x128xf32>
    %13 = arith.select %10, %8, %12 : vector<1x8x8x128xi1>, vector<1x8x8x128xf32>
    %c0_8 = arith.constant 0 : index
    %c0_9 = arith.constant 0 : index
    %c0_10 = arith.constant 0 : index
    %c0_11 = arith.constant 0 : index
    %14 = vector.load %arg4[%c0_8, %c0_9, %c0_10, %c0_11] : memref<1x8x8x128xf32, #tpu.memory_space<vmem>>, vector<1x8x8x128xf32>
    tpu.vector_store %arg4[%c0_8, %c0_9, %c0_10, %c0_11], %13 {strides = array<i32>} : memref<1x8x8x128xf32, #tpu.memory_space<vmem>>, vector<1x8x8x128xf32>,
    return
  }
  func.func @transform_0(%arg0: i32) -> (i32, i32, i32, i32) {
    %c0_i32 = arith.constant 0 : i32
    %c0_i32_0 = arith.constant 0 : i32
    %c0_i32_1 = arith.constant 0 : i32
    %c0_i32_2 = arith.constant 0 : i32
    return %arg0, %c0_i32, %c0_i32_0, %c0_i32_1 : i32, i32, i32, i32
  }
  func.func @transform_1(%arg0: i32) -> (i32, i32) {
    %c0_i32 = arith.constant 0 : i32
    %c0_i32_0 = arith.constant 0 : i32
    %c0_i32_1 = arith.constant 0 : i32
    return %c0_i32, %c0_i32_0 : i32, i32
  }
  func.func @transform_2(%arg0: i32) -> (i32, i32) {
    %c0_i32 = arith.constant 0 : i32
    %c0_i32_0 = arith.constant 0 : i32
    %c0_i32_1 = arith.constant 0 : i32
    return %c0_i32, %c0_i32_0 : i32, i32
  }
  func.func @transform_3(%arg0: i32) -> (i32, i32, i32, i32) {
    %c0_i32 = arith.constant 0 : i32
    %c0_i32_0 = arith.constant 0 : i32
    %c0_i32_1 = arith.constant 0 : i32
    %c0_i32_2 = arith.constant 0 : i32
    return %arg0, %c0_i32, %c0_i32_0, %c0_i32_1 : i32, i32, i32, i32
  }
}

</mosaic_0001>

<llo_original>
// kernel: group8_forward.3
$region0: #{group8_forward.3}
  #allocation0 [shape = 'u32[]', space=smem, size = 0x4, offset = 0x4, fixed_abs, tag = 'smem constant byte address 0x4 - core index']
  #allocation1 [shape = 'u32[144,128]{1,0:T(1,128)}', space=vmem, size = 0x12000, scoped, tag = 'internal scratch']
  %s0 = inlined_call_operand.vmem [shape: f32[2,8,8,128], index: 0, kind: input, shape index: {}]
  %s1 = inlined_call_operand.vmem [shape: f32[1,128], index: 1, kind: input, shape index: {}]
  %s2 = inlined_call_operand.vmem [shape: f32[1,128], index: 2, kind: input, shape index: {}]
  %s3 = inlined_call_operand.hbm [shape: f32[2,8,8,128], index: 3, kind: output, shape index: {}]
  %s4 = sld [smem:[#allocation0]]
  $region45: #{group8_forward.3} parent=0
    _
  %s6 = ssub.s32 1, %s4
  %s7 = scalar_select 0, %s6, %s4
  $region1: #{group8_forward.3} parent=0
    #allocation2 [shape = 'u8[65536]{0}', space=vmem, size = 0x10000, scoped, tag = 'output window, operand 0']
    #allocation3 [shape = 's32[2]{0}', space=sflag, size = 0x8, scoped, tag = 'scoped memory for group8_forward.3']
    %8 = vsyncpa [#allocation3], 0
    %s9 = scalar_lea.sflag [#allocation3], 1
    %10 = vsyncpa %s9, 0
    loop: start=0, step=1, limit=4
    $region2: #{group8_forward.3} parent=1 // loop_pre_header
      _
    $region3: #{group8_forward.3} parent=1 // loop_header
      %s12 = sphi 0, %s16
      %p13 = scmp.ge.s32.totalorder %s12, 4
      %s22 = sphi 0, %s24
      %s25 = sphi 0, %s22
      %s26 = sphi 0, %s25
      %s42 = sphi 0, %s26
      %s46 = sphi 0, %s46
      %s48 = sphi 0, %s46
      %s49 = sphi 0, %s48
      %s63 = sphi 0, %s49
      %s67 = sphi 0, %s67
      %s69 = sphi 0, %s67
      %s70 = sphi 0, %s69
      %s84 = sphi 0, %s70
      %s90 = sphi 0, %s92
      %s93 = sphi 0, %s90
      %s94 = sphi 0, %s93
      %s110 = sphi 0, %s94
    $region4: #{group8_forward.3} parent=1 // loop_header_branch
      %15 = sbr.rel (%p13) target = $region8
    $region5: #{group8_forward.3} parent=1 // loop_body
      %s17 = ssub.s32 %s12, 1
      %s18 = ssub.s32 %s12, 2
      %s19 = sadd.s32 %s12, 1
      %s20 = ssub.s32 %s12, %s19
      %p21 = scmp.eq.s32.totalorder %s20, 0
      %s23 = sadd.s32 %s22, 1
      %s24 = scalar_select %p21, %s22, %s23
      %p27 = pneg %p21
      %p28 = scmp.eq.s32.totalorder %s12, 1
      %p29 = por %p27, %p28
      %p30 = scmp.ne.s32.totalorder %s22, %s25
      %p31 = scmp.eq.s32.totalorder %s12, 0
      %p32 = por %p30, %p31
      %p33 = scmp.ne.s32.totalorder %s22, %s25
      %p34 = scmp.eq.s32.totalorder %s17, 1
      %p35 = por %p33, %p34
      %p36 = scmp.ne.s32.totalorder %s25, %s26
      %p37 = scmp.eq.s32.totalorder %s17, 0
      %p38 = por %p36, %p37
      %p39 = scmp.ne.s32.totalorder %s25, %s26
      %p40 = scmp.eq.s32.totalorder %s18, 1
      %p41 = por %p39, %p40
      %p43 = scmp.ne.s32.totalorder %s26, %s42
      %p44 = scmp.eq.s32.totalorder %s18, 0
      %p45 = por %p43, %p44
      %s47 = sadd.s32 %s46, 1
      %p50 = scmp.eq.s32.totalorder %s12, 1
      %p51 = scmp.ne.s32.totalorder %s46, %s48
      %p52 = scmp.eq.s32.totalorder %s12, 0
      %p53 = por %p51, %p52
      %p54 = scmp.ne.s32.totalorder %s46, %s48
      %p55 = scmp.eq.s32.totalorder %s17, 1
      %p56 = por %p54, %p55
      %p57 = scmp.ne.s32.totalorder %s48, %s49
      %p58 = scmp.eq.s32.totalorder %s17, 0
      %p59 = por %p57, %p58
      %p60 = scmp.ne.s32.totalorder %s48, %s49
      %p61 = scmp.eq.s32.totalorder %s18, 1
      %p62 = por %p60, %p61
      %p64 = scmp.ne.s32.totalorder %s49, %s63
      %p65 = scmp.eq.s32.totalorder %s18, 0
      %p66 = por %p64, %p65
      %s68 = sadd.s32 %s67, 1
      %p71 = scmp.eq.s32.totalorder %s12, 1
      %p72 = scmp.ne.s32.totalorder %s67, %s69
      %p73 = scmp.eq.s32.totalorder %s12, 0
      %p74 = por %p72, %p73
      %p75 = scmp.ne.s32.totalorder %s67, %s69
      %p76 = scmp.eq.s32.totalorder %s17, 1
      %p77 = por %p75, %p76
      %p78 = scmp.ne.s32.totalorder %s69, %s70
      %p79 = scmp.eq.s32.totalorder %s17, 0
      %p80 = por %p78, %p79
      %p81 = scmp.ne.s32.totalorder %s69, %s70
      %p82 = scmp.eq.s32.totalorder %s18, 1
      %p83 = por %p81, %p82
      %p85 = scmp.ne.s32.totalorder %s70, %s84
      %p86 = scmp.eq.s32.totalorder %s18, 0
      %p87 = por %p85, %p86
      %s88 = ssub.s32 %s12, %s19
      %p89 = scmp.eq.s32.totalorder %s88, 0
      %s91 = sadd.s32 %s90, 1
      %s92 = scalar_select %p89, %s90, %s91
      %p95 = pneg %p89
      %p96 = scmp.eq.s32.totalorder %s12, 1
      %p97 = por %p95, %p96
      %p98 = scmp.ne.s32.totalorder %s90, %s93
      %p99 = scmp.eq.s32.totalorder %s12, 0
      %p100 = por %p98, %p99
      %p101 = scmp.ne.s32.totalorder %s90, %s93
      %p102 = scmp.eq.s32.totalorder %s17, 1
      %p103 = por %p101, %p102
      %p104 = scmp.ne.s32.totalorder %s93, %s94
      %p105 = scmp.eq.s32.totalorder %s17, 0
      %p106 = por %p104, %p105
      %p107 = scmp.ne.s32.totalorder %s93, %s94
      %p108 = scmp.eq.s32.totalorder %s18, 1
      %p109 = por %p107, %p108
      %p111 = scmp.ne.s32.totalorder %s94, %s110
      %p112 = scmp.eq.s32.totalorder %s18, 0
      %p113 = por %p111, %p112
      %p114 = scmp.le.s32.totalorder 1, %s12
      %p115 = scmp.lt.s32.totalorder %s12, 3
      %p116 = pnand %p114, %p115
      %p117 = pneg %p116
      // Predicated region
      $region9: #{group8_forward.3} parent=5 // pred_check
        _
      $region10: #{group8_forward.3} parent=5 // pred_check_branch
        %119 = sbr.rel (%p116) target = $region12
      $region11: #{group8_forward.3} parent=5 // pred_region
        %s120 = ssub.s32 %s12, 1
        // Predicated region
        $region13: #{group8_forward.3} parent=11 // pred_check
          %p121 = pneg %p59
        $region14: #{group8_forward.3} parent=11 // pred_check_branch
          %123 = sbr.rel (%p121) target = $region16
        $region15: #{group8_forward.3} parent=11 // pred_region
          _
        $region16: #{group8_forward.3} parent=11 // pred_fallthru
          _
        // Predicated region
        $region17: #{group8_forward.3} parent=11 // pred_check
          %p124 = pneg %p80
        $region18: #{group8_forward.3} parent=11 // pred_check_branch
          %126 = sbr.rel (%p124) target = $region20
        $region19: #{group8_forward.3} parent=11 // pred_region
          _
        $region20: #{group8_forward.3} parent=11 // pred_fallthru
          _
      $region12: #{group8_forward.3} parent=5 // pred_fallthru
        _
      %p127 = scmp.lt.s32.totalorder %s12, 2
      // Predicated region
      $region21: #{group8_forward.3} parent=5 // pred_check
        %p128 = pneg %p127
      $region22: #{group8_forward.3} parent=5 // pred_check_branch
        %130 = sbr.rel (%p128) target = $region24
      $region23: #{group8_forward.3} parent=5 // pred_region
        // Predicated region
        $region25: #{group8_forward.3} parent=23 // pred_check
          %p131 = pneg %p32
        $region26: #{group8_forward.3} parent=23 // pred_check_branch
          %133 = sbr.rel (%p131) target = $region28
        $region27: #{group8_forward.3} parent=23 // pred_region
          %p134 = scmp.lt.s32.totalorder %s12, 1
          %s135 = scalar_select %p134, %s12, 1
          %s136 = smul.addr %s135, 8
          %s137 = smul.addr %s136, 8
          %s138 = scalar_lea.vmem %s0, %s137
        $region28: #{group8_forward.3} parent=23 // pred_fallthru
          _
      $region24: #{group8_forward.3} parent=5 // pred_fallthru
        _
      %p139 = scmp.le.s32.totalorder 1, %s12
      %p140 = scmp.lt.s32.totalorder %s12, 3
      %p141 = pnand %p139, %p140
      %p142 = pneg %p141
      // Predicated region
      $region29: #{group8_forward.3} parent=5 // pred_check
        _
      $region30: #{group8_forward.3} parent=5 // pred_check_branch
        %144 = sbr.rel (%p141) target = $region32
      $region31: #{group8_forward.3} parent=5 // pred_region
        %s145 = ssub.s32 %s12, 1
        %p146 = scmp.lt.s32.totalorder %s17, 1
        %s147 = scalar_select %p146, %s17, 1
        %s148 = smul.addr %s147, 8
        %s149 = smul.addr %s148, 8
        %s150 = scalar_lea.vmem %s0, %s149
        %p151 = pneg %p38
        %p152 = pneg %p35
        %p153 = pneg %p59
        %p154 = pneg %p56
        %p155 = pneg %p80
        %p156 = pneg %p77
        %p157 = pneg %p106
        %p158 = pneg %p103
        %s159 = sand.u32 %s93, 1
        %s160 = scalar_lea.sflag [#allocation3], %s159
        %s161 = sand.u32 %s93, 1
        %s162 = smul.addr %s161, 64
        %s163 = scalar_lea.vmem [#allocation2], %s162
        %p164 = scmp.lt.s32.totalorder %s17, 1
        %s165 = scalar_select %p164, %s17, 1
        %s166 = smul.addr %s165, 8
        %s167 = smul.addr %s166, 8
        %s168 = scalar_lea.vmem %s0, %s167
        %v169 = vld [vmem:[%s168] sm:$0xff]
        %v170 = vld [vmem:[%s168 + $0x8] sm:$0xff]
        %v171 = vld [vmem:[%s168 + $0x10] sm:$0xff]
        %v172 = vld [vmem:[%s168 + $0x18] sm:$0xff]
        %v173 = vld [vmem:[%s168 + $0x20] sm:$0xff]
        %v174 = vld [vmem:[%s168 + $0x28] sm:$0xff]
        %v175 = vld [vmem:[%s168 + $0x30] sm:$0xff]
        %v176 = vld [vmem:[%s168 + $0x38] sm:$0xff]
        %v177 = vld [vmem:[%s1] sm:$0x1]
        %v178 = vld [vmem:[%s2] sm:$0x1]
        %v180 = vlaneseq
        %v181 = vshrl.u32 %v180, 7
        %v182 = vsub.s32 0, %v181
        %v183 = vrot.slane %v177, %v182
        %v185 = vmul.f32 %v169, %v183
        %v186 = vmul.f32 %v170, %v183
        %v187 = vmul.f32 %v171, %v183
        %v188 = vmul.f32 %v172, %v183
        %v189 = vmul.f32 %v173, %v183
        %v190 = vmul.f32 %v174, %v183
        %v191 = vmul.f32 %v175, %v183
        %v192 = vmul.f32 %v176, %v183
        %v194 = vlaneseq
        %v195 = vshrl.u32 %v194, 7
        %v196 = vsub.s32 0, %v195
        %v197 = vrot.slane %v178, %v196
        %v199 = vadd.f32 %v185, %v197
        %v200 = vadd.f32 %v186, %v197
        %v201 = vadd.f32 %v187, %v197
        %v202 = vadd.f32 %v188, %v197
        %v203 = vadd.f32 %v189, %v197
        %v204 = vadd.f32 %v190, %v197
        %v205 = vadd.f32 %v191, %v197
        %v206 = vadd.f32 %v192, %v197
        %vm207 = vcmp.gt.f32.partialorder %v199, 0.0
        %vm208 = vcmp.gt.f32.partialorder %v200, 0.0
        %vm209 = vcmp.gt.f32.partialorder %v201, 0.0
        %vm210 = vcmp.gt.f32.partialorder %v202, 0.0
        %vm211 = vcmp.gt.f32.partialorder %v203, 0.0
        %vm212 = vcmp.gt.f32.partialorder %v204, 0.0
        %vm213 = vcmp.gt.f32.partialorder %v205, 0.0
        %vm214 = vcmp.gt.f32.partialorder %v206, 0.0
        %v215 = vmul.f32 %v199, 0.2
        %v216 = vmul.f32 %v200, 0.2
        %v217 = vmul.f32 %v201, 0.2
        %v218 = vmul.f32 %v202, 0.2
        %v219 = vmul.f32 %v203, 0.2
        %v220 = vmul.f32 %v204, 0.2
        %v221 = vmul.f32 %v205, 0.2
        %v222 = vmul.f32 %v206, 0.2
        %v223 = vsel %vm207, %v199, %v215
        %v224 = vsel %vm208, %v200, %v216
        %v225 = vsel %vm209, %v201, %v217
        %v226 = vsel %vm210, %v202, %v218
        %v227 = vsel %vm211, %v203, %v219
        %v228 = vsel %vm212, %v204, %v220
        %v229 = vsel %vm213, %v205, %v221
        %v230 = vsel %vm214, %v206, %v222
        %231 = vst [vmem:[%s163] sm:$0xff] %v223
        %232 = vst [vmem:[%s163 + $0x8] sm:$0xff] %v224
        %233 = vst [vmem:[%s163 + $0x10] sm:$0xff] %v225
        %234 = vst [vmem:[%s163 + $0x18] sm:$0xff] %v226
        %235 = vst [vmem:[%s163 + $0x20] sm:$0xff] %v227
        %236 = vst [vmem:[%s163 + $0x28] sm:$0xff] %v228
        %237 = vst [vmem:[%s163 + $0x30] sm:$0xff] %v229
        %238 = vst [vmem:[%s163 + $0x38] sm:$0xff] %v230
        %s239 = sand.u32 %s93, 1
        %s240 = scalar_lea.sflag [#allocation3], %s239
        %s241 = sand.u32 %s93, 1
        %s242 = smul.addr %s241, 64
        %s243 = scalar_lea.vmem [#allocation2], %s242
        // Predicated region
        $region33: #{group8_forward.3} parent=31 // pred_check
          %p244 = pneg %p103
        $region34: #{group8_forward.3} parent=31 // pred_check_branch
          %246 = sbr.rel (%p244) target = $region36
        $region35: #{group8_forward.3} parent=31 // pred_region
          %s248 = ssub.s32 1024, 1024
          %249 = vsyncadd %s240, %s248
          %s250 = smul.addr %s17, 8
          %s251 = smul.addr %s250, 128
          %s252 = scalar_lea.hbm %s3, %s251
          %s253 = sshll.u32 %s243, 4
          %s254 = int_to_ptr.vmem [resolvable:$true] %s253
          %259 = dma.vmem_to_hbm [thread:$0]  %s254, 1024, %s252, %s240, 128, 128, 8
        $region36: #{group8_forward.3} parent=31 // pred_fallthru
          _
      $region32: #{group8_forward.3} parent=5 // pred_fallthru
        _
      %p260 = scmp.le.s32.totalorder 2, %s12
      // Predicated region
      $region37: #{group8_forward.3} parent=5 // pred_check
        %p261 = pneg %p260
      $region38: #{group8_forward.3} parent=5 // pred_check_branch
        %263 = sbr.rel (%p261) target = $region40
      $region39: #{group8_forward.3} parent=5 // pred_region
        %s264 = ssub.s32 %s12, 2
        // Predicated region
        $region41: #{group8_forward.3} parent=39 // pred_check
          %p265 = pneg %p109
        $region42: #{group8_forward.3} parent=39 // pred_check_branch
          %267 = sbr.rel (%p265) target = $region44
        $region43: #{group8_forward.3} parent=39 // pred_region
          %s268 = sand.u32 %s94, 1
          %s269 = scalar_lea.sflag [#allocation3], %s268
          %s270 = sand.u32 %s94, 1
          %s271 = smul.addr %s270, 64
          %s272 = scalar_lea.vmem [#allocation2], %s271
          %273 = dma.done %s269, 1024
        $region44: #{group8_forward.3} parent=39 // pred_fallthru
          _
      $region40: #{group8_forward.3} parent=5 // pred_fallthru
        _
    $region6: #{group8_forward.3} parent=1 // loop_footer
      %s16 = sadd.s32 1, %s12
    $region7: #{group8_forward.3} parent=1 // loop_footer_branch
      %11 = sbr.rel target = $region3
    $region8: #{group8_forward.3} parent=1 // loop_exit
      _
    %274 = vsyncpa [#allocation3], 1
    %s275 = scalar_lea.sflag [#allocation3], 1
    %276 = vsyncpa %s275, 1

// kernel: group8_forward.2
$region0: #{group8_forward.2}
  #allocation0 [shape = 'u32[]', space=smem, size = 0x4, offset = 0x4, fixed_abs, tag = 'smem constant byte address 0x4 - core index']
  #allocation1 [shape = 'u32[144,128]{1,0:T(1,128)}', space=vmem, size = 0x12000, scoped, tag = 'internal scratch']
  %s0 = inlined_call_operand.vmem [shape: f32[2,4,9,9,128], index: 0, kind: input, shape index: {}]
  %s1 = inlined_call_operand.vmem [shape: f32[9,128,128], index: 1, kind: input, shape index: {}]
  %s2 = inlined_call_operand.vmem [shape: f32[1,128], index: 2, kind: input, shape index: {}]
  %s3 = inlined_call_operand.vmem [shape: f32[2,8,8,128], index: 3, kind: output, shape index: {0}]
  %s4 = inlined_call_operand.vmem [shape: f32[2,1,128], index: 4, kind: output, shape index: {1}]
  %s5 = inlined_call_operand.vmem [shape: f32[2,1,128], index: 5, kind: output, shape index: {2}]
  %6 = xla_tuple %s3, %s4, %s5
  %s7 = sld [smem:[#allocation0]]
  $region61: #{group8_forward.2} parent=0
    _
  %s9 = ssub.s32 1, %s7
  %s10 = scalar_select 0, %s9, %s7
  loop: start=0, step=1, limit=4
  $region2: #{group8_forward.2} parent=0 // loop_pre_header
    _
  $region3: #{group8_forward.2} parent=0 // loop_header
    %s12 = sphi 0, %s16
    %p13 = scmp.ge.s32.totalorder %s12, 4
    %s22 = sphi 0, %s24
    %s25 = sphi 0, %s22
    %s26 = sphi 0, %s25
    %s42 = sphi 0, %s26
    %s46 = sphi 0, %s46
    %s48 = sphi 0, %s46
    %s49 = sphi 0, %s48
    %s63 = sphi 0, %s49
    %s67 = sphi 0, %s67
    %s69 = sphi 0, %s67
    %s70 = sphi 0, %s69
    %s84 = sphi 0, %s70
    %s90 = sphi 0, %s92
    %s93 = sphi 0, %s90
    %s94 = sphi 0, %s93
    %s110 = sphi 0, %s94
    %s116 = sphi 0, %s118
    %s119 = sphi 0, %s116
    %s120 = sphi 0, %s119
    %s136 = sphi 0, %s120
    %s142 = sphi 0, %s144
    %s145 = sphi 0, %s142
    %s146 = sphi 0, %s145
    %s162 = sphi 0, %s146
  $region4: #{group8_forward.2} parent=0 // loop_header_branch
    %15 = sbr.rel (%p13) target = $region8
  $region5: #{group8_forward.2} parent=0 // loop_body
    %s17 = ssub.s32 %s12, 1
    %s18 = ssub.s32 %s12, 2
    %s19 = sadd.s32 %s12, 1
    %s20 = ssub.s32 %s12, %s19
    %p21 = scmp.eq.s32.totalorder %s20, 0
    %s23 = sadd.s32 %s22, 1
    %s24 = scalar_select %p21, %s22, %s23
    %p27 = pneg %p21
    %p28 = scmp.eq.s32.totalorder %s12, 1
    %p29 = por %p27, %p28
    %p30 = scmp.ne.s32.totalorder %s22, %s25
    %p31 = scmp.eq.s32.totalorder %s12, 0
    %p32 = por %p30, %p31
    %p33 = scmp.ne.s32.totalorder %s22, %s25
    %p34 = scmp.eq.s32.totalorder %s17, 1
    %p35 = por %p33, %p34
    %p36 = scmp.ne.s32.totalorder %s25, %s26
    %p37 = scmp.eq.s32.totalorder %s17, 0
    %p38 = por %p36, %p37
    %p39 = scmp.ne.s32.totalorder %s25, %s26
    %p40 = scmp.eq.s32.totalorder %s18, 1
    %p41 = por %p39, %p40
    %p43 = scmp.ne.s32.totalorder %s26, %s42
    %p44 = scmp.eq.s32.totalorder %s18, 0
    %p45 = por %p43, %p44
    %s47 = sadd.s32 %s46, 1
    %p50 = scmp.eq.s32.totalorder %s12, 1
    %p51 = scmp.ne.s32.totalorder %s46, %s48
    %p52 = scmp.eq.s32.totalorder %s12, 0
    %p53 = por %p51, %p52
    %p54 = scmp.ne.s32.totalorder %s46, %s48
    %p55 = scmp.eq.s32.totalorder %s17, 1
    %p56 = por %p54, %p55
    %p57 = scmp.ne.s32.totalorder %s48, %s49
    %p58 = scmp.eq.s32.totalorder %s17, 0
    %p59 = por %p57, %p58
    %p60 = scmp.ne.s32.totalorder %s48, %s49
    %p61 = scmp.eq.s32.totalorder %s18, 1
    %p62 = por %p60, %p61
    %p64 = scmp.ne.s32.totalorder %s49, %s63
    %p65 = scmp.eq.s32.totalorder %s18, 0
    %p66 = por %p64, %p65
    %s68 = sadd.s32 %s67, 1
    %p71 = scmp.eq.s32.totalorder %s12, 1
    %p72 = scmp.ne.s32.totalorder %s67, %s69
    %p73 = scmp.eq.s32.totalorder %s12, 0
    %p74 = por %p72, %p73
    %p75 = scmp.ne.s32.totalorder %s67, %s69
    %p76 = scmp.eq.s32.totalorder %s17, 1
    %p77 = por %p75, %p76
    %p78 = scmp.ne.s32.totalorder %s69, %s70
    %p79 = scmp.eq.s32.totalorder %s17, 0
    %p80 = por %p78, %p79
    %p81 = scmp.ne.s32.totalorder %s69, %s70
    %p82 = scmp.eq.s32.totalorder %s18, 1
    %p83 = por %p81, %p82
    %p85 = scmp.ne.s32.totalorder %s70, %s84
    %p86 = scmp.eq.s32.totalorder %s18, 0
    %p87 = por %p85, %p86
    %s88 = ssub.s32 %s12, %s19
    %p89 = scmp.eq.s32.totalorder %s88, 0
    %s91 = sadd.s32 %s90, 1
    %s92 = scalar_select %p89, %s90, %s91
    %p95 = pneg %p89
    %p96 = scmp.eq.s32.totalorder %s12, 1
    %p97 = por %p95, %p96
    %p98 = scmp.ne.s32.totalorder %s90, %s93
    %p99 = scmp.eq.s32.totalorder %s12, 0
    %p100 = por %p98, %p99
    %p101 = scmp.ne.s32.totalorder %s90, %s93
    %p102 = scmp.eq.s32.totalorder %s17, 1
    %p103 = por %p101, %p102
    %p104 = scmp.ne.s32.totalorder %s93, %s94
    %p105 = scmp.eq.s32.totalorder %s17, 0
    %p106 = por %p104, %p105
    %p107 = scmp.ne.s32.totalorder %s93, %s94
    %p108 = scmp.eq.s32.totalorder %s18, 1
    %p109 = por %p107, %p108
    %p111 = scmp.ne.s32.totalorder %s94, %s110
    %p112 = scmp.eq.s32.totalorder %s18, 0
    %p113 = por %p111, %p112
    %s114 = ssub.s32 %s12, %s19
    %p115 = scmp.eq.s32.totalorder %s114, 0
    %s117 = sadd.s32 %s116, 1
    %s118 = scalar_select %p115, %s116, %s117
    %p121 = pneg %p115
    %p122 = scmp.eq.s32.totalorder %s12, 1
    %p123 = por %p121, %p122
    %p124 = scmp.ne.s32.totalorder %s116, %s119
    %p125 = scmp.eq.s32.totalorder %s12, 0
    %p126 = por %p124, %p125
    %p127 = scmp.ne.s32.totalorder %s116, %s119
    %p128 = scmp.eq.s32.totalorder %s17, 1
    %p129 = por %p127, %p128
    %p130 = scmp.ne.s32.totalorder %s119, %s120
    %p131 = scmp.eq.s32.totalorder %s17, 0
    %p132 = por %p130, %p131
    %p133 = scmp.ne.s32.totalorder %s119, %s120
    %p134 = scmp.eq.s32.totalorder %s18, 1
    %p135 = por %p133, %p134
    %p137 = scmp.ne.s32.totalorder %s120, %s136
    %p138 = scmp.eq.s32.totalorder %s18, 0
    %p139 = por %p137, %p138
    %s140 = ssub.s32 %s12, %s19
    %p141 = scmp.eq.s32.totalorder %s140, 0
    %s143 = sadd.s32 %s142, 1
    %s144 = scalar_select %p141, %s142, %s143
    %p147 = pneg %p141
    %p148 = scmp.eq.s32.totalorder %s12, 1
    %p149 = por %p147, %p148
    %p150 = scmp.ne.s32.totalorder %s142, %s145
    %p151 = scmp.eq.s32.totalorder %s12, 0
    %p152 = por %p150, %p151
    %p153 = scmp.ne.s32.totalorder %s142, %s145
    %p154 = scmp.eq.s32.totalorder %s17, 1
    %p155 = por %p153, %p154
    %p156 = scmp.ne.s32.totalorder %s145, %s146
    %p157 = scmp.eq.s32.totalorder %s17, 0
    %p158 = por %p156, %p157
    %p159 = scmp.ne.s32.totalorder %s145, %s146
    %p160 = scmp.eq.s32.totalorder %s18, 1
    %p161 = por %p159, %p160
    %p163 = scmp.ne.s32.totalorder %s146, %s162
    %p164 = scmp.eq.s32.totalorder %s18, 0
    %p165 = por %p163, %p164
    %p166 = scmp.le.s32.totalorder 1, %s12
    %p167 = scmp.lt.s32.totalorder %s12, 3
    %p168 = pnand %p166, %p167
    %p169 = pneg %p168
    // Predicated region
    $region9: #{group8_forward.2} parent=5 // pred_check
      _
    $region10: #{group8_forward.2} parent=5 // pred_check_branch
      %171 = sbr.rel (%p168) target = $region12
    $region11: #{group8_forward.2} parent=5 // pred_region
      %s172 = ssub.s32 %s12, 1
      // Predicated region
      $region13: #{group8_forward.2} parent=11 // pred_check
        %p173 = pneg %p59
      $region14: #{group8_forward.2} parent=11 // pred_check_branch
        %175 = sbr.rel (%p173) target = $region16
      $region15: #{group8_forward.2} parent=11 // pred_region
        _
      $region16: #{group8_forward.2} parent=11 // pred_fallthru
        _
      // Predicated region
      $region17: #{group8_forward.2} parent=11 // pred_check
        %p176 = pneg %p80
      $region18: #{group8_forward.2} parent=11 // pred_check_branch
        %178 = sbr.rel (%p176) target = $region20
      $region19: #{group8_forward.2} parent=11 // pred_region
        _
      $region20: #{group8_forward.2} parent=11 // pred_fallthru
        _
    $region12: #{group8_forward.2} parent=5 // pred_fallthru
      _
    %p179 = scmp.lt.s32.totalorder %s12, 2
    // Predicated region
    $region21: #{group8_forward.2} parent=5 // pred_check
      %p180 = pneg %p179
    $region22: #{group8_forward.2} parent=5 // pred_check_branch
      %182 = sbr.rel (%p180) target = $region24
    $region23: #{group8_forward.2} parent=5 // pred_region
      // Predicated region
      $region25: #{group8_forward.2} parent=23 // pred_check
        %p183 = pneg %p32
      $region26: #{group8_forward.2} parent=23 // pred_check_branch
        %185 = sbr.rel (%p183) target = $region28
      $region27: #{group8_forward.2} parent=23 // pred_region
        %p186 = scmp.lt.s32.totalorder %s12, 1
        %s187 = scalar_select %p186, %s12, 1
        %s188 = smul.addr %s187, 72
        %s189 = smul.addr %s188, 8
        %s190 = scalar_lea.vmem %s0, %s189
      $region28: #{group8_forward.2} parent=23 // pred_fallthru
        _
    $region24: #{group8_forward.2} parent=5 // pred_fallthru
      _
    %p191 = scmp.le.s32.totalorder 1, %s12
    %p192 = scmp.lt.s32.totalorder %s12, 3
    %p193 = pnand %p191, %p192
    %p194 = pneg %p193
    // Predicated region
    $region29: #{group8_forward.2} parent=5 // pred_check
      _
    $region30: #{group8_forward.2} parent=5 // pred_check_branch
      %196 = sbr.rel (%p193) target = $region32
    $region31: #{group8_forward.2} parent=5 // pred_region
      %s197 = ssub.s32 %s12, 1
      %p198 = scmp.lt.s32.totalorder %s17, 1
      %s199 = scalar_select %p198, %s17, 1
      %s200 = smul.addr %s199, 72
      %s201 = smul.addr %s200, 8
      %s202 = scalar_lea.vmem %s0, %s201
      %p203 = pneg %p38
      %p204 = pneg %p35
      %p205 = pneg %p59
      %p206 = pneg %p56
      %p207 = pneg %p80
      %p208 = pneg %p77
      %p209 = pneg %p106
      %p210 = pneg %p103
      %p211 = scmp.lt.s32.totalorder %s17, 1
      %s212 = scalar_select %p211, %s17, 1
      %s213 = smul.addr %s212, 8
      %s214 = smul.addr %s213, 8
      %s215 = scalar_lea.vmem %s3, %s214
      %p216 = pneg %p132
      %p217 = pneg %p129
      %p218 = scmp.lt.s32.totalorder %s17, 1
      %s219 = scalar_select %p218, %s17, 1
      %s220 = scalar_lea.vmem %s4, %s219
      %p221 = pneg %p158
      %p222 = pneg %p155
      %p223 = scmp.lt.s32.totalorder %s17, 1
      %s224 = scalar_select %p223, %s17, 1
      %s225 = scalar_lea.vmem %s5, %s224
      %p226 = scmp.lt.s32.totalorder %s17, 1
      %s227 = scalar_select %p226, %s17, 1
      %s228 = smul.addr %s227, 72
      %s229 = smul.addr %s228, 8
      %s230 = scalar_lea.vmem %s0, %s229
      %p231 = scmp.lt.s32.totalorder %s17, 1
      %s232 = scalar_select %p231, %s17, 1
      %s233 = smul.addr %s232, 8
      %s234 = smul.addr %s233, 8
      %s235 = scalar_lea.vmem %s3, %s234
      %p236 = scmp.lt.s32.totalorder %s17, 1
      %s237 = scalar_select %p236, %s17, 1
      %s238 = scalar_lea.vmem %s4, %s237
      %p239 = scmp.lt.s32.totalorder %s17, 1
      %s240 = scalar_select %p239, %s17, 1
      %s241 = scalar_lea.vmem %s5, %s240
      %v242 = vld [vmem:[%s230] sm:$0xff]
      %v243 = vld [vmem:[%s230 + $0x10] sm:$0xff]
      %v244 = vld [vmem:[%s230 + $0x20] sm:$0xff]
      %v245 = vld [vmem:[%s230 + $0x30] sm:$0xff]
      %v246 = vld [vmem:[%s230 + $0x40] sm:$0xff]
      %v247 = vld [vmem:[%s230 + $0x50] sm:$0xff]
      %v248 = vld [vmem:[%s230 + $0x60] sm:$0xff]
      %v249 = vld [vmem:[%s230 + $0x70] sm:$0xff]
      %v250 = vld [vmem:[%s1] sm:$0xff]
      %v251 = vld [vmem:[%s1 + $0x8] sm:$0xff]
      %v252 = vld [vmem:[%s1 + $0x10] sm:$0xff]
      %v253 = vld [vmem:[%s1 + $0x18] sm:$0xff]
      %v254 = vld [vmem:[%s1 + $0x20] sm:$0xff]
      %v255 = vld [vmem:[%s1 + $0x28] sm:$0xff]
      %v256 = vld [vmem:[%s1 + $0x30] sm:$0xff]
      %v257 = vld [vmem:[%s1 + $0x38] sm:$0xff]
      %v258 = vld [vmem:[%s1 + $0x40] sm:$0xff]
      %v259 = vld [vmem:[%s1 + $0x48] sm:$0xff]
      %v260 = vld [vmem:[%s1 + $0x50] sm:$0xff]
      %v261 = vld [vmem:[%s1 + $0x58] sm:$0xff]
      %v262 = vld [vmem:[%s1 + $0x60] sm:$0xff]
      %v263 = vld [vmem:[%s1 + $0x68] sm:$0xff]
      %v264 = vld [vmem:[%s1 + $0x70] sm:$0xff]
      %v265 = vld [vmem:[%s1 + $0x78] sm:$0xff]
      %s266 = scalar_lea.vmem %s230, 144
      %v267 = vld [vmem:[%s266] sm:$0xff]
      %v268 = vld [vmem:[%s266 + $0x10] sm:$0xff]
      %v269 = vld [vmem:[%s266 + $0x20] sm:$0xff]
      %v270 = vld [vmem:[%s266 + $0x30] sm:$0xff]
      %v271 = vld [vmem:[%s266 + $0x40] sm:$0xff]
      %v272 = vld [vmem:[%s266 + $0x50] sm:$0xff]
      %v273 = vld [vmem:[%s266 + $0x60] sm:$0xff]
      %v274 = vld [vmem:[%s266 + $0x70] sm:$0xff]
      %s275 = scalar_lea.vmem %s1, 128
      %v276 = vld [vmem:[%s275] sm:$0xff]
      %v277 = vld [vmem:[%s275 + $0x8] sm:$0xff]
      %v278 = vld [vmem:[%s275 + $0x10] sm:$0xff]
      %v279 = vld [vmem:[%s275 + $0x18] sm:$0xff]
      %v280 = vld [vmem:[%s275 + $0x20] sm:$0xff]
      %v281 = vld [vmem:[%s275 + $0x28] sm:$0xff]
      %v282 = vld [vmem:[%s275 + $0x30] sm:$0xff]
      %v283 = vld [vmem:[%s275 + $0x38] sm:$0xff]
      %v284 = vld [vmem:[%s275 + $0x40] sm:$0xff]
      %v285 = vld [vmem:[%s275 + $0x48] sm:$0xff]
      %v286 = vld [vmem:[%s275 + $0x50] sm:$0xff]
      %v287 = vld [vmem:[%s275 + $0x58] sm:$0xff]
      %v288 = vld [vmem:[%s275 + $0x60] sm:$0xff]
      %v289 = vld [vmem:[%s275 + $0x68] sm:$0xff]
      %v290 = vld [vmem:[%s275 + $0x70] sm:$0xff]
      %v291 = vld [vmem:[%s275 + $0x78] sm:$0xff]
      %292 = vmatprep.subr.mxu0 0.0
      %293 = vmatpush1.msra.mxu0 %v291
      %294 = vmatprep.subr.mxu0 0.0
      %295 = vmatpush1.msra.mxu0 %v290
      %296 = vmatprep.subr.mxu0 0.0
      %297 = vmatpush1.msra.mxu0 %v289
      %298 = vmatprep.subr.mxu0 0.0
      %299 = vmatpush1.msra.mxu0 %v288
      %300 = vmatprep.subr.mxu0 0.0
      %301 = vmatpush1.msra.mxu0 %v287
      %302 = vmatprep.subr.mxu0 0.0
      %303 = vmatpush1.msra.mxu0 %v286
      %304 = vmatprep.subr.mxu0 0.0
      %305 = vmatpush1.msra.mxu0 %v285
      %306 = vmatprep.subr.mxu0 0.0
      %307 = vmatpush1.msra.mxu0 %v284
      %308 = vmatprep.subr.mxu0 0.0
      %309 = vmatpush1.msra.mxu0 %v283
      %310 = vmatprep.subr.mxu0 0.0
      %311 = vmatpush1.msra.mxu0 %v282
      %312 = vmatprep.subr.mxu0 0.0
      %313 = vmatpush1.msra.mxu0 %v281
      %314 = vmatprep.subr.mxu0 0.0
      %315 = vmatpush1.msra.mxu0 %v280
      %316 = vmatprep.subr.mxu0 0.0
      %317 = vmatpush1.msra.mxu0 %v279
      %318 = vmatprep.subr.mxu0 0.0
      %319 = vmatpush1.msra.mxu0 %v278
      %320 = vmatprep.subr.mxu0 0.0
      %321 = vmatpush1.msra.mxu0 %v277
      %322 = vmatprep.subr.mxu0 0.0
      %323 = vmatpush1.msra.mxu0 %v276
      %324 = vmatprep.subr.mxu0 0.0
      %325 = vmatpush2.msra.mxu0 0.0
      %326 = vmatprep.subr.mxu0 0.0
      %327 = vmatpush2.msra.mxu0 0.0
      %328 = vmatprep.subr.mxu0 0.0
      %329 = vmatpush2.msra.mxu0 0.0
      %330 = vmatprep.subr.mxu0 0.0
      %331 = vmatpush2.msra.mxu0 0.0
      %332 = vmatprep.subr.mxu0 0.0
      %333 = vmatpush2.msra.mxu0 0.0
      %334 = vmatprep.subr.mxu0 0.0
      %335 = vmatpush2.msra.mxu0 0.0
      %336 = vmatprep.subr.mxu0 0.0
      %337 = vmatpush2.msra.mxu0 0.0
      %338 = vmatprep.subr.mxu0 0.0
      %339 = vmatpush2.msra.mxu0 0.0
      %340 = vmatprep.subr.mxu0 0.0
      %341 = vmatpush2.msra.mxu0 0.0
      %342 = vmatprep.subr.mxu0 0.0
      %343 = vmatpush2.msra.mxu0 0.0
      %344 = vmatprep.subr.mxu0 0.0
      %345 = vmatpush2.msra.mxu0 0.0
      %346 = vmatprep.subr.mxu0 0.0
      %347 = vmatpush2.msra.mxu0 0.0
      %348 = vmatprep.subr.mxu0 0.0
      %349 = vmatpush2.msra.mxu0 0.0
      %350 = vmatprep.subr.mxu0 0.0
      %351 = vmatpush2.msra.mxu0 0.0
      %352 = vmatprep.subr.mxu0 0.0
      %353 = vmatpush2.msra.mxu0 0.0
      %354 = vmatprep.subr.mxu0 0.0
      %355 = vmatpush2.msra.mxu0 0.0
      %356 = vmatprep.mubr.f32.mxu0 0.0
      %357 = vmatmul.mubr.f32.gmra.mxu0 %v267
      %v358 = vpop.f32.mrf.mxu0
      %v359 = vadd.f32 0.0, %v358
      %v360 = vpop.f32.mrf.mxu0
      %361 = vmatprep.mubr.f32.mxu0 0.0
      %362 = vmatmul.mubr.f32.gmra.mxu0 %v268
      %v363 = vpop.f32.mrf.mxu0
      %v364 = vadd.f32 0.0, %v363
      %v365 = vpop.f32.mrf.mxu0
      %366 = vmatprep.mubr.f32.mxu0 0.0
      %367 = vmatmul.mubr.f32.gmra.mxu0 %v269
      %v368 = vpop.f32.mrf.mxu0
      %v369 = vadd.f32 0.0, %v368
      %v370 = vpop.f32.mrf.mxu0
      %371 = vmatprep.mubr.f32.mxu0 0.0
      %372 = vmatmul.mubr.f32.gmra.mxu0 %v270
      %v373 = vpop.f32.mrf.mxu0
      %v374 = vadd.f32 0.0, %v373
      %v375 = vpop.f32.mrf.mxu0
      %376 = vmatprep.mubr.f32.mxu0 0.0
      %377 = vmatmul.mubr.f32.gmra.mxu0 %v271
      %v378 = vpop.f32.mrf.mxu0
      %v379 = vadd.f32 0.0, %v378
      %v380 = vpop.f32.mrf.mxu0
      %381 = vmatprep.mubr.f32.mxu0 0.0
      %382 = vmatmul.mubr.f32.gmra.mxu0 %v272
      %v383 = vpop.f32.mrf.mxu0
      %v384 = vadd.f32 0.0, %v383
      %v385 = vpop.f32.mrf.mxu0
      %386 = vmatprep.mubr.f32.mxu0 0.0
      %387 = vmatmul.mubr.f32.gmra.mxu0 %v273
      %v388 = vpop.f32.mrf.mxu0
      %v389 = vadd.f32 0.0, %v388
      %v390 = vpop.f32.mrf.mxu0
      %391 = vmatprep.mubr.f32.mxu0 0.0
      %392 = vmatmul.mubr.f32.gmra.mxu0 %v274
      %v393 = vpop.f32.mrf.mxu0
      %v394 = vadd.f32 0.0, %v393
      %v395 = vpop.f32.mrf.mxu0
      %396 = vdwg.mxu0
      %397 = vmatprep.subr.mxu0 0.0
      %398 = vmatpush1.msra.mxu0 %v265
      %399 = vmatprep.subr.mxu0 0.0
      %400 = vmatpush1.msra.mxu0 %v264
      %401 = vmatprep.subr.mxu0 0.0
      %402 = vmatpush1.msra.mxu0 %v263
      %403 = vmatprep.subr.mxu0 0.0
      %404 = vmatpush1.msra.mxu0 %v262
      %405 = vmatprep.subr.mxu0 0.0
      %406 = vmatpush1.msra.mxu0 %v261
      %407 = vmatprep.subr.mxu0 0.0
      %408 = vmatpush1.msra.mxu0 %v260
      %409 = vmatprep.subr.mxu0 0.0
      %410 = vmatpush1.msra.mxu0 %v259
      %411 = vmatprep.subr.mxu0 0.0
      %412 = vmatpush1.msra.mxu0 %v258
      %413 = vmatprep.subr.mxu0 0.0
      %414 = vmatpush1.msra.mxu0 %v257
      %415 = vmatprep.subr.mxu0 0.0
      %416 = vmatpush1.msra.mxu0 %v256
      %417 = vmatprep.subr.mxu0 0.0
      %418 = vmatpush1.msra.mxu0 %v255
      %419 = vmatprep.subr.mxu0 0.0
      %420 = vmatpush1.msra.mxu0 %v254
      %421 = vmatprep.subr.mxu0 0.0
      %422 = vmatpush1.msra.mxu0 %v253
      %423 = vmatprep.subr.mxu0 0.0
      %424 = vmatpush1.msra.mxu0 %v252
      %425 = vmatprep.subr.mxu0 0.0
      %426 = vmatpush1.msra.mxu0 %v251
      %427 = vmatprep.subr.mxu0 0.0
      %428 = vmatpush1.msra.mxu0 %v250
      %429 = vmatprep.subr.mxu0 0.0
      %430 = vmatpush2.msra.mxu0 0.0
      %431 = vmatprep.subr.mxu0 0.0
      %432 = vmatpush2.msra.mxu0 0.0
      %433 = vmatprep.subr.mxu0 0.0
      %434 = vmatpush2.msra.mxu0 0.0
      %435 = vmatprep.subr.mxu0 0.0
      %436 = vmatpush2.msra.mxu0 0.0
      %437 = vmatprep.subr.mxu0 0.0
      %438 = vmatpush2.msra.mxu0 0.0
      %439 = vmatprep.subr.mxu0 0.0
      %440 = vmatpush2.msra.mxu0 0.0
      %441 = vmatprep.subr.mxu0 0.0
      %442 = vmatpush2.msra.mxu0 0.0
      %443 = vmatprep.subr.mxu0 0.0
      %444 = vmatpush2.msra.mxu0 0.0
      %445 = vmatprep.subr.mxu0 0.0
      %446 = vmatpush2.msra.mxu0 0.0
      %447 = vmatprep.subr.mxu0 0.0
      %448 = vmatpush2.msra.mxu0 0.0
      %449 = vmatprep.subr.mxu0 0.0
      %450 = vmatpush2.msra.mxu0 0.0
      %451 = vmatprep.subr.mxu0 0.0
      %452 = vmatpush2.msra.mxu0 0.0
      %453 = vmatprep.subr.mxu0 0.0
      %454 = vmatpush2.msra.mxu0 0.0
      %455 = vmatprep.subr.mxu0 0.0
      %456 = vmatpush2.msra.mxu0 0.0
      %457 = vmatprep.subr.mxu0 0.0
      %458 = vmatpush2.msra.mxu0 0.0
      %459 = vmatprep.subr.mxu0 0.0
      %460 = vmatpush2.msra.mxu0 0.0
      %461 = vmatprep.mubr.f32.mxu0 0.0
      %462 = vmatmul.mubr.f32.gmra.mxu0 %v242
      %v463 = vpop.f32.mrf.mxu0
      %v464 = vadd.f32 %v359, %v463
      %v465 = vpop.f32.mrf.mxu0
      %466 = vmatprep.mubr.f32.mxu0 0.0
      %467 = vmatmul.mubr.f32.gmra.mxu0 %v243
      %v468 = vpop.f32.mrf.mxu0
      %v469 = vadd.f32 %v364, %v468
      %v470 = vpop.f32.mrf.mxu0
      %471 = vmatprep.mubr.f32.mxu0 0.0
      %472 = vmatmul.mubr.f32.gmra.mxu0 %v244
      %v473 = vpop.f32.mrf.mxu0
      %v474 = vadd.f32 %v369, %v473
      %v475 = vpop.f32.mrf.mxu0
      %476 = vmatprep.mubr.f32.mxu0 0.0
      %477 = vmatmul.mubr.f32.gmra.mxu0 %v245
      %v478 = vpop.f32.mrf.mxu0
      %v479 = vadd.f32 %v374, %v478
      %v480 = vpop.f32.mrf.mxu0
      %481 = vmatprep.mubr.f32.mxu0 0.0
      %482 = vmatmul.mubr.f32.gmra.mxu0 %v246
      %v483 = vpop.f32.mrf.mxu0
      %v484 = vadd.f32 %v379, %v483
      %v485 = vpop.f32.mrf.mxu0
      %486 = vmatprep.mubr.f32.mxu0 0.0
      %487 = vmatmul.mubr.f32.gmra.mxu0 %v247
      %v488 = vpop.f32.mrf.mxu0
      %v489 = vadd.f32 %v384, %v488
      %v490 = vpop.f32.mrf.mxu0
      %491 = vmatprep.mubr.f32.mxu0 0.0
      %492 = vmatmul.mubr.f32.gmra.mxu0 %v248
      %v493 = vpop.f32.mrf.mxu0
      %v494 = vadd.f32 %v389, %v493
      %v495 = vpop.f32.mrf.mxu0
      %496 = vmatprep.mubr.f32.mxu0 0.0
      %497 = vmatmul.mubr.f32.gmra.mxu0 %v249
      %v498 = vpop.f32.mrf.mxu0
      %v499 = vadd.f32 %v394, %v498
      %v500 = vpop.f32.mrf.mxu0
      %501 = vdwg.mxu0
      %v502 = vld [vmem:[%s230 + $0x1] sm:$0xff]
      %v503 = vld [vmem:[%s230 + $0x11] sm:$0xff]
      %v504 = vld [vmem:[%s230 + $0x21] sm:$0xff]
      %v505 = vld [vmem:[%s230 + $0x31] sm:$0xff]
      %v506 = vld [vmem:[%s230 + $0x41] sm:$0xff]
      %v507 = vld [vmem:[%s230 + $0x51] sm:$0xff]
      %v508 = vld [vmem:[%s230 + $0x61] sm:$0xff]
      %v509 = vld [vmem:[%s230 + $0x71] sm:$0xff]
      %s510 = scalar_lea.vmem %s1, 256
      %v511 = vld [vmem:[%s510] sm:$0xff]
      %v512 = vld [vmem:[%s510 + $0x8] sm:$0xff]
      %v513 = vld [vmem:[%s510 + $0x10] sm:$0xff]
      %v514 = vld [vmem:[%s510 + $0x18] sm:$0xff]
      %v515 = vld [vmem:[%s510 + $0x20] sm:$0xff]
      %v516 = vld [vmem:[%s510 + $0x28] sm:$0xff]
      %v517 = vld [vmem:[%s510 + $0x30] sm:$0xff]
      %v518 = vld [vmem:[%s510 + $0x38] sm:$0xff]
      %v519 = vld [vmem:[%s510 + $0x40] sm:$0xff]
      %v520 = vld [vmem:[%s510 + $0x48] sm:$0xff]
      %v521 = vld [vmem:[%s510 + $0x50] sm:$0xff]
      %v522 = vld [vmem:[%s510 + $0x58] sm:$0xff]
      %v523 = vld [vmem:[%s510 + $0x60] sm:$0xff]
      %v524 = vld [vmem:[%s510 + $0x68] sm:$0xff]
      %v525 = vld [vmem:[%s510 + $0x70] sm:$0xff]
      %v526 = vld [vmem:[%s510 + $0x78] sm:$0xff]
      %527 = vmatprep.subr.mxu0 0.0
      %528 = vmatpush1.msra.mxu0 %v526
      %529 = vmatprep.subr.mxu0 0.0
      %530 = vmatpush1.msra.mxu0 %v525
      %531 = vmatprep.subr.mxu0 0.0
      %532 = vmatpush1.msra.mxu0 %v524
      %533 = vmatprep.subr.mxu0 0.0
      %534 = vmatpush1.msra.mxu0 %v523
      %535 = vmatprep.subr.mxu0 0.0
      %536 = vmatpush1.msra.mxu0 %v522
      %537 = vmatprep.subr.mxu0 0.0
      %538 = vmatpush1.msra.mxu0 %v521
      %539 = vmatprep.subr.mxu0 0.0
      %540 = vmatpush1.msra.mxu0 %v520
      %541 = vmatprep.subr.mxu0 0.0
      %542 = vmatpush1.msra.mxu0 %v519
      %543 = vmatprep.subr.mxu0 0.0
      %544 = vmatpush1.msra.mxu0 %v518
      %545 = vmatprep.subr.mxu0 0.0
      %546 = vmatpush1.msra.mxu0 %v517
      %547 = vmatprep.subr.mxu0 0.0
      %548 = vmatpush1.msra.mxu0 %v516
      %549 = vmatprep.subr.mxu0 0.0
      %550 = vmatpush1.msra.mxu0 %v515
      %551 = vmatprep.subr.mxu0 0.0
      %552 = vmatpush1.msra.mxu0 %v514
      %553 = vmatprep.subr.mxu0 0.0
      %554 = vmatpush1.msra.mxu0 %v513
      %555 = vmatprep.subr.mxu0 0.0
      %556 = vmatpush1.msra.mxu0 %v512
      %557 = vmatprep.subr.mxu0 0.0
      %558 = vmatpush1.msra.mxu0 %v511
      %559 = vmatprep.subr.mxu0 0.0
      %560 = vmatpush2.msra.mxu0 0.0
      %561 = vmatprep.subr.mxu0 0.0
      %562 = vmatpush2.msra.mxu0 0.0
      %563 = vmatprep.subr.mxu0 0.0
      %564 = vmatpush2.msra.mxu0 0.0
      %565 = vmatprep.subr.mxu0 0.0
      %566 = vmatpush2.msra.mxu0 0.0
      %567 = vmatprep.subr.mxu0 0.0
      %568 = vmatpush2.msra.mxu0 0.0
      %569 = vmatprep.subr.mxu0 0.0
      %570 = vmatpush2.msra.mxu0 0.0
      %571 = vmatprep.subr.mxu0 0.0
      %572 = vmatpush2.msra.mxu0 0.0
      %573 = vmatprep.subr.mxu0 0.0
      %574 = vmatpush2.msra.mxu0 0.0
      %575 = vmatprep.subr.mxu0 0.0
      %576 = vmatpush2.msra.mxu0 0.0
      %577 = vmatprep.subr.mxu0 0.0
      %578 = vmatpush2.msra.mxu0 0.0
      %579 = vmatprep.subr.mxu0 0.0
      %580 = vmatpush2.msra.mxu0 0.0
      %581 = vmatprep.subr.mxu0 0.0
      %582 = vmatpush2.msra.mxu0 0.0
      %583 = vmatprep.subr.mxu0 0.0
      %584 = vmatpush2.msra.mxu0 0.0
      %585 = vmatprep.subr.mxu0 0.0
      %586 = vmatpush2.msra.mxu0 0.0
      %587 = vmatprep.subr.mxu0 0.0
      %588 = vmatpush2.msra.mxu0 0.0
      %589 = vmatprep.subr.mxu0 0.0
      %590 = vmatpush2.msra.mxu0 0.0
      %591 = vmatprep.mubr.f32.mxu0 0.0
      %592 = vmatmul.mubr.f32.gmra.mxu0 %v502
      %v593 = vpop.f32.mrf.mxu0
      %v594 = vadd.f32 0.0, %v593
      %v595 = vpop.f32.mrf.mxu0
      %596 = vmatprep.mubr.f32.mxu0 0.0
      %597 = vmatmul.mubr.f32.gmra.mxu0 %v503
      %v598 = vpop.f32.mrf.mxu0
      %v599 = vadd.f32 0.0, %v598
      %v600 = vpop.f32.mrf.mxu0
      %601 = vmatprep.mubr.f32.mxu0 0.0
      %602 = vmatmul.mubr.f32.gmra.mxu0 %v504
      %v603 = vpop.f32.mrf.mxu0
      %v604 = vadd.f32 0.0, %v603
      %v605 = vpop.f32.mrf.mxu0
      %606 = vmatprep.mubr.f32.mxu0 0.0
      %607 = vmatmul.mubr.f32.gmra.mxu0 %v505
      %v608 = vpop.f32.mrf.mxu0
      %v609 = vadd.f32 0.0, %v608
      %v610 = vpop.f32.mrf.mxu0
      %611 = vmatprep.mubr.f32.mxu0 0.0
      %612 = vmatmul.mubr.f32.gmra.mxu0 %v506
      %v613 = vpop.f32.mrf.mxu0
      %v614 = vadd.f32 0.0, %v613
      %v615 = vpop.f32.mrf.mxu0
      %616 = vmatprep.mubr.f32.mxu0 0.0
      %617 = vmatmul.mubr.f32.gmra.mxu0 %v507
      %v618 = vpop.f32.mrf.mxu0
      %v619 = vadd.f32 0.0, %v618
      %v620 = vpop.f32.mrf.mxu0
      %621 = vmatprep.mubr.f32.mxu0 0.0
      %622 = vmatmul.mubr.f32.gmra.mxu0 %v508
      %v623 = vpop.f32.mrf.mxu0
      %v624 = vadd.f32 0.0, %v623
      %v625 = vpop.f32.mrf.mxu0
      %626 = vmatprep.mubr.f32.mxu0 0.0
      %627 = vmatmul.mubr.f32.gmra.mxu0 %v509
      %v628 = vpop.f32.mrf.mxu0
      %v629 = vadd.f32 0.0, %v628
      %v630 = vpop.f32.mrf.mxu0
      %631 = vdwg.mxu0
      %v632 = vadd.f32 %v464, %v594
      %v633 = vadd.f32 %v469, %v599
      %v634 = vadd.f32 %v474, %v604
      %v635 = vadd.f32 %v479, %v609
      %v636 = vadd.f32 %v484, %v614
      %v637 = vadd.f32 %v489, %v619
      %v638 = vadd.f32 %v494, %v624
      %v639 = vadd.f32 %v499, %v629
      %s640 = scalar_lea.vmem %s230, 288
      %v641 = vld [vmem:[%s640] sm:$0xff]
      %v642 = vld [vmem:[%s640 + $0x10] sm:$0xff]
      %v643 = vld [vmem:[%s640 + $0x20] sm:$0xff]
      %v644 = vld [vmem:[%s640 + $0x30] sm:$0xff]
      %v645 = vld [vmem:[%s640 + $0x40] sm:$0xff]
      %v646 = vld [vmem:[%s640 + $0x50] sm:$0xff]
      %v647 = vld [vmem:[%s640 + $0x60] sm:$0xff]
      %v648 = vld [vmem:[%s640 + $0x70] sm:$0xff]
      %s649 = scalar_lea.vmem %s1, 384
      %v650 = vld [vmem:[%s649] sm:$0xff]
      %v651 = vld [vmem:[%s649 + $0x8] sm:$0xff]
      %v652 = vld [vmem:[%s649 + $0x10] sm:$0xff]
      %v653 = vld [vmem:[%s649 + $0x18] sm:$0xff]
      %v654 = vld [vmem:[%s649 + $0x20] sm:$0xff]
      %v655 = vld [vmem:[%s649 + $0x28] sm:$0xff]
      %v656 = vld [vmem:[%s649 + $0x30] sm:$0xff]
      %v657 = vld [vmem:[%s649 + $0x38] sm:$0xff]
      %v658 = vld [vmem:[%s649 + $0x40] sm:$0xff]
      %v659 = vld [vmem:[%s649 + $0x48] sm:$0xff]
      %v660 = vld [vmem:[%s649 + $0x50] sm:$0xff]
      %v661 = vld [vmem:[%s649 + $0x58] sm:$0xff]
      %v662 = vld [vmem:[%s649 + $0x60] sm:$0xff]
      %v663 = vld [vmem:[%s649 + $0x68] sm:$0xff]
      %v664 = vld [vmem:[%s649 + $0x70] sm:$0xff]
      %v665 = vld [vmem:[%s649 + $0x78] sm:$0xff]
      %666 = vmatprep.subr.mxu0 0.0
      %667 = vmatpush1.msra.mxu0 %v665
      %668 = vmatprep.subr.mxu0 0.0
      %669 = vmatpush1.msra.mxu0 %v664
      %670 = vmatprep.subr.mxu0 0.0
      %671 = vmatpush1.msra.mxu0 %v663
      %672 = vmatprep.subr.mxu0 0.0
      %673 = vmatpush1.msra.mxu0 %v662
      %674 = vmatprep.subr.mxu0 0.0
      %675 = vmatpush1.msra.mxu0 %v661
      %676 = vmatprep.subr.mxu0 0.0
      %677 = vmatpush1.msra.mxu0 %v660
      %678 = vmatprep.subr.mxu0 0.0
      %679 = vmatpush1.msra.mxu0 %v659
      %680 = vmatprep.subr.mxu0 0.0
      %681 = vmatpush1.msra.mxu0 %v658
      %682 = vmatprep.subr.mxu0 0.0
      %683 = vmatpush1.msra.mxu0 %v657
      %684 = vmatprep.subr.mxu0 0.0
      %685 = vmatpush1.msra.mxu0 %v656
      %686 = vmatprep.subr.mxu0 0.0
      %687 = vmatpush1.msra.mxu0 %v655
      %688 = vmatprep.subr.mxu0 0.0
      %689 = vmatpush1.msra.mxu0 %v654
      %690 = vmatprep.subr.mxu0 0.0
      %691 = vmatpush1.msra.mxu0 %v653
      %692 = vmatprep.subr.mxu0 0.0
      %693 = vmatpush1.msra.mxu0 %v652
      %694 = vmatprep.subr.mxu0 0.0
      %695 = vmatpush1.msra.mxu0 %v651
      %696 = vmatprep.subr.mxu0 0.0
      %697 = vmatpush1.msra.mxu0 %v650
      %698 = vmatprep.subr.mxu0 0.0
      %699 = vmatpush2.msra.mxu0 0.0
      %700 = vmatprep.subr.mxu0 0.0
      %701 = vmatpush2.msra.mxu0 0.0
      %702 = vmatprep.subr.mxu0 0.0
      %703 = vmatpush2.msra.mxu0 0.0
      %704 = vmatprep.subr.mxu0 0.0
      %705 = vmatpush2.msra.mxu0 0.0
      %706 = vmatprep.subr.mxu0 0.0
      %707 = vmatpush2.msra.mxu0 0.0
      %708 = vmatprep.subr.mxu0 0.0
      %709 = vmatpush2.msra.mxu0 0.0
      %710 = vmatprep.subr.mxu0 0.0
      %711 = vmatpush2.msra.mxu0 0.0
      %712 = vmatprep.subr.mxu0 0.0
      %713 = vmatpush2.msra.mxu0 0.0
      %714 = vmatprep.subr.mxu0 0.0
      %715 = vmatpush2.msra.mxu0 0.0
      %716 = vmatprep.subr.mxu0 0.0
      %717 = vmatpush2.msra.mxu0 0.0
      %718 = vmatprep.subr.mxu0 0.0
      %719 = vmatpush2.msra.mxu0 0.0
      %720 = vmatprep.subr.mxu0 0.0
      %721 = vmatpush2.msra.mxu0 0.0
      %722 = vmatprep.subr.mxu0 0.0
      %723 = vmatpush2.msra.mxu0 0.0
      %724 = vmatprep.subr.mxu0 0.0
      %725 = vmatpush2.msra.mxu0 0.0
      %726 = vmatprep.subr.mxu0 0.0
      %727 = vmatpush2.msra.mxu0 0.0
      %728 = vmatprep.subr.mxu0 0.0
      %729 = vmatpush2.msra.mxu0 0.0
      %730 = vmatprep.mubr.f32.mxu0 0.0
      %731 = vmatmul.mubr.f32.gmra.mxu0 %v641
      %v732 = vpop.f32.mrf.mxu0
      %v733 = vadd.f32 0.0, %v732
      %v734 = vpop.f32.mrf.mxu0
      %735 = vmatprep.mubr.f32.mxu0 0.0
      %736 = vmatmul.mubr.f32.gmra.mxu0 %v642
      %v737 = vpop.f32.mrf.mxu0
      %v738 = vadd.f32 0.0, %v737
      %v739 = vpop.f32.mrf.mxu0
      %740 = vmatprep.mubr.f32.mxu0 0.0
      %741 = vmatmul.mubr.f32.gmra.mxu0 %v643
      %v742 = vpop.f32.mrf.mxu0
      %v743 = vadd.f32 0.0, %v742
      %v744 = vpop.f32.mrf.mxu0
      %745 = vmatprep.mubr.f32.mxu0 0.0
      %746 = vmatmul.mubr.f32.gmra.mxu0 %v644
      %v747 = vpop.f32.mrf.mxu0
      %v748 = vadd.f32 0.0, %v747
      %v749 = vpop.f32.mrf.mxu0
      %750 = vmatprep.mubr.f32.mxu0 0.0
      %751 = vmatmul.mubr.f32.gmra.mxu0 %v645
      %v752 = vpop.f32.mrf.mxu0
      %v753 = vadd.f32 0.0, %v752
      %v754 = vpop.f32.mrf.mxu0
      %755 = vmatprep.mubr.f32.mxu0 0.0
      %756 = vmatmul.mubr.f32.gmra.mxu0 %v646
      %v757 = vpop.f32.mrf.mxu0
      %v758 = vadd.f32 0.0, %v757
      %v759 = vpop.f32.mrf.mxu0
      %760 = vmatprep.mubr.f32.mxu0 0.0
      %761 = vmatmul.mubr.f32.gmra.mxu0 %v647
      %v762 = vpop.f32.mrf.mxu0
      %v763 = vadd.f32 0.0, %v762
      %v764 = vpop.f32.mrf.mxu0
      %765 = vmatprep.mubr.f32.mxu0 0.0
      %766 = vmatmul.mubr.f32.gmra.mxu0 %v648
      %v767 = vpop.f32.mrf.mxu0
      %v768 = vadd.f32 0.0, %v767
      %v769 = vpop.f32.mrf.mxu0
      %770 = vdwg.mxu0
      %v771 = vadd.f32 %v632, %v733
      %v772 = vadd.f32 %v633, %v738
      %v773 = vadd.f32 %v634, %v743
      %v774 = vadd.f32 %v635, %v748
      %v775 = vadd.f32 %v636, %v753
      %v776 = vadd.f32 %v637, %v758
      %v777 = vadd.f32 %v638, %v763
      %v778 = vadd.f32 %v639, %v768
      %s779 = scalar_lea.vmem %s230, 432
      %v780 = vld [vmem:[%s779] sm:$0xff]
      %v781 = vld [vmem:[%s779 + $0x10] sm:$0xff]
      %v782 = vld [vmem:[%s779 + $0x20] sm:$0xff]
      %v783 = vld [vmem:[%s779 + $0x30] sm:$0xff]
      %v784 = vld [vmem:[%s779 + $0x40] sm:$0xff]
      %v785 = vld [vmem:[%s779 + $0x50] sm:$0xff]
      %v786 = vld [vmem:[%s779 + $0x60] sm:$0xff]
      %v787 = vld [vmem:[%s779 + $0x70] sm:$0xff]
      %s788 = scalar_lea.vmem %s1, 512
      %v789 = vld [vmem:[%s788] sm:$0xff]
      %v790 = vld [vmem:[%s788 + $0x8] sm:$0xff]
      %v791 = vld [vmem:[%s788 + $0x10] sm:$0xff]
      %v792 = vld [vmem:[%s788 + $0x18] sm:$0xff]
      %v793 = vld [vmem:[%s788 + $0x20] sm:$0xff]
      %v794 = vld [vmem:[%s788 + $0x28] sm:$0xff]
      %v795 = vld [vmem:[%s788 + $0x30] sm:$0xff]
      %v796 = vld [vmem:[%s788 + $0x38] sm:$0xff]
      %v797 = vld [vmem:[%s788 + $0x40] sm:$0xff]
      %v798 = vld [vmem:[%s788 + $0x48] sm:$0xff]
      %v799 = vld [vmem:[%s788 + $0x50] sm:$0xff]
      %v800 = vld [vmem:[%s788 + $0x58] sm:$0xff]
      %v801 = vld [vmem:[%s788 + $0x60] sm:$0xff]
      %v802 = vld [vmem:[%s788 + $0x68] sm:$0xff]
      %v803 = vld [vmem:[%s788 + $0x70] sm:$0xff]
      %v804 = vld [vmem:[%s788 + $0x78] sm:$0xff]
      %805 = vmatprep.subr.mxu0 0.0
      %806 = vmatpush1.msra.mxu0 %v804
      %807 = vmatprep.subr.mxu0 0.0
      %808 = vmatpush1.msra.mxu0 %v803
      %809 = vmatprep.subr.mxu0 0.0
      %810 = vmatpush1.msra.mxu0 %v802
      %811 = vmatprep.subr.mxu0 0.0
      %812 = vmatpush1.msra.mxu0 %v801
      %813 = vmatprep.subr.mxu0 0.0
      %814 = vmatpush1.msra.mxu0 %v800
      %815 = vmatprep.subr.mxu0 0.0
      %816 = vmatpush1.msra.mxu0 %v799
      %817 = vmatprep.subr.mxu0 0.0
      %818 = vmatpush1.msra.mxu0 %v798
      %819 = vmatprep.subr.mxu0 0.0
      %820 = vmatpush1.msra.mxu0 %v797
      %821 = vmatprep.subr.mxu0 0.0
      %822 = vmatpush1.msra.mxu0 %v796
      %823 = vmatprep.subr.mxu0 0.0
      %824 = vmatpush1.msra.mxu0 %v795
      %825 = vmatprep.subr.mxu0 0.0
      %826 = vmatpush1.msra.mxu0 %v794
      %827 = vmatprep.subr.mxu0 0.0
      %828 = vmatpush1.msra.mxu0 %v793
      %829 = vmatprep.subr.mxu0 0.0
      %830 = vmatpush1.msra.mxu0 %v792
      %831 = vmatprep.subr.mxu0 0.0
      %832 = vmatpush1.msra.mxu0 %v791
      %833 = vmatprep.subr.mxu0 0.0
      %834 = vmatpush1.msra.mxu0 %v790
      %835 = vmatprep.subr.mxu0 0.0
      %836 = vmatpush1.msra.mxu0 %v789
      %837 = vmatprep.subr.mxu0 0.0
      %838 = vmatpush2.msra.mxu0 0.0
      %839 = vmatprep.subr.mxu0 0.0
      %840 = vmatpush2.msra.mxu0 0.0
      %841 = vmatprep.subr.mxu0 0.0
      %842 = vmatpush2.msra.mxu0 0.0
      %843 = vmatprep.subr.mxu0 0.0
      %844 = vmatpush2.msra.mxu0 0.0
      %845 = vmatprep.subr.mxu0 0.0
      %846 = vmatpush2.msra.mxu0 0.0
      %847 = vmatprep.subr.mxu0 0.0
      %848 = vmatpush2.msra.mxu0 0.0
      %849 = vmatprep.subr.mxu0 0.0
      %850 = vmatpush2.msra.mxu0 0.0
      %851 = vmatprep.subr.mxu0 0.0
      %852 = vmatpush2.msra.mxu0 0.0
      %853 = vmatprep.subr.mxu0 0.0
      %854 = vmatpush2.msra.mxu0 0.0
      %855 = vmatprep.subr.mxu0 0.0
      %856 = vmatpush2.msra.mxu0 0.0
      %857 = vmatprep.subr.mxu0 0.0
      %858 = vmatpush2.msra.mxu0 0.0
      %859 = vmatprep.subr.mxu0 0.0
      %860 = vmatpush2.msra.mxu0 0.0
      %861 = vmatprep.subr.mxu0 0.0
      %862 = vmatpush2.msra.mxu0 0.0
      %863 = vmatprep.subr.mxu0 0.0
      %864 = vmatpush2.msra.mxu0 0.0
      %865 = vmatprep.subr.mxu0 0.0
      %866 = vmatpush2.msra.mxu0 0.0
      %867 = vmatprep.subr.mxu0 0.0
      %868 = vmatpush2.msra.mxu0 0.0
      %869 = vmatprep.mubr.f32.mxu0 0.0
      %870 = vmatmul.mubr.f32.gmra.mxu0 %v780
      %v871 = vpop.f32.mrf.mxu0
      %v872 = vadd.f32 0.0, %v871
      %v873 = vpop.f32.mrf.mxu0
      %874 = vmatprep.mubr.f32.mxu0 0.0
      %875 = vmatmul.mubr.f32.gmra.mxu0 %v781
      %v876 = vpop.f32.mrf.mxu0
      %v877 = vadd.f32 0.0, %v876
      %v878 = vpop.f32.mrf.mxu0
      %879 = vmatprep.mubr.f32.mxu0 0.0
      %880 = vmatmul.mubr.f32.gmra.mxu0 %v782
      %v881 = vpop.f32.mrf.mxu0
      %v882 = vadd.f32 0.0, %v881
      %v883 = vpop.f32.mrf.mxu0
      %884 = vmatprep.mubr.f32.mxu0 0.0
      %885 = vmatmul.mubr.f32.gmra.mxu0 %v783
      %v886 = vpop.f32.mrf.mxu0
      %v887 = vadd.f32 0.0, %v886
      %v888 = vpop.f32.mrf.mxu0
      %889 = vmatprep.mubr.f32.mxu0 0.0
      %890 = vmatmul.mubr.f32.gmra.mxu0 %v784
      %v891 = vpop.f32.mrf.mxu0
      %v892 = vadd.f32 0.0, %v891
      %v893 = vpop.f32.mrf.mxu0
      %894 = vmatprep.mubr.f32.mxu0 0.0
      %895 = vmatmul.mubr.f32.gmra.mxu0 %v785
      %v896 = vpop.f32.mrf.mxu0
      %v897 = vadd.f32 0.0, %v896
      %v898 = vpop.f32.mrf.mxu0
      %899 = vmatprep.mubr.f32.mxu0 0.0
      %900 = vmatmul.mubr.f32.gmra.mxu0 %v786
      %v901 = vpop.f32.mrf.mxu0
      %v902 = vadd.f32 0.0, %v901
      %v903 = vpop.f32.mrf.mxu0
      %904 = vmatprep.mubr.f32.mxu0 0.0
      %905 = vmatmul.mubr.f32.gmra.mxu0 %v787
      %v906 = vpop.f32.mrf.mxu0
      %v907 = vadd.f32 0.0, %v906
      %v908 = vpop.f32.mrf.mxu0
      %909 = vdwg.mxu0
      %v910 = vadd.f32 %v771, %v872
      %v911 = vadd.f32 %v772, %v877
      %v912 = vadd.f32 %v773, %v882
      %v913 = vadd.f32 %v774, %v887
      %v914 = vadd.f32 %v775, %v892
      %v915 = vadd.f32 %v776, %v897
      %v916 = vadd.f32 %v777, %v902
      %v917 = vadd.f32 %v778, %v907
      %v918 = vld [vmem:[%s640 + $0x1] sm:$0xff]
      %v919 = vld [vmem:[%s640 + $0x11] sm:$0xff]
      %v920 = vld [vmem:[%s640 + $0x21] sm:$0xff]
      %v921 = vld [vmem:[%s640 + $0x31] sm:$0xff]
      %v922 = vld [vmem:[%s640 + $0x41] sm:$0xff]
      %v923 = vld [vmem:[%s640 + $0x51] sm:$0xff]
      %v924 = vld [vmem:[%s640 + $0x61] sm:$0xff]
      %v925 = vld [vmem:[%s640 + $0x71] sm:$0xff]
      %s926 = scalar_lea.vmem %s1, 640
      %v927 = vld [vmem:[%s926] sm:$0xff]
      %v928 = vld [vmem:[%s926 + $0x8] sm:$0xff]
      %v929 = vld [vmem:[%s926 + $0x10] sm:$0xff]
      %v930 = vld [vmem:[%s926 + $0x18] sm:$0xff]
      %v931 = vld [vmem:[%s926 + $0x20] sm:$0xff]
      %v932 = vld [vmem:[%s926 + $0x28] sm:$0xff]
      %v933 = vld [vmem:[%s926 + $0x30] sm:$0xff]
      %v934 = vld [vmem:[%s926 + $0x38] sm:$0xff]
      %v935 = vld [vmem:[%s926 + $0x40] sm:$0xff]
      %v936 = vld [vmem:[%s926 + $0x48] sm:$0xff]
      %v937 = vld [vmem:[%s926 + $0x50] sm:$0xff]
      %v938 = vld [vmem:[%s926 + $0x58] sm:$0xff]
      %v939 = vld [vmem:[%s926 + $0x60] sm:$0xff]
      %v940 = vld [vmem:[%s926 + $0x68] sm:$0xff]
      %v941 = vld [vmem:[%s926 + $0x70] sm:$0xff]
      %v942 = vld [vmem:[%s926 + $0x78] sm:$0xff]
      %943 = vmatprep.subr.mxu0 0.0
      %944 = vmatpush1.msra.mxu0 %v942
      %945 = vmatprep.subr.mxu0 0.0
      %946 = vmatpush1.msra.mxu0 %v941
      %947 = vmatprep.subr.mxu0 0.0
      %948 = vmatpush1.msra.mxu0 %v940
      %949 = vmatprep.subr.mxu0 0.0
      %950 = vmatpush1.msra.mxu0 %v939
      %951 = vmatprep.subr.mxu0 0.0
      %952 = vmatpush1.msra.mxu0 %v938
      %953 = vmatprep.subr.mxu0 0.0
      %954 = vmatpush1.msra.mxu0 %v937
      %955 = vmatprep.subr.mxu0 0.0
      %956 = vmatpush1.msra.mxu0 %v936
      %957 = vmatprep.subr.mxu0 0.0
      %958 = vmatpush1.msra.mxu0 %v935
      %959 = vmatprep.subr.mxu0 0.0
      %960 = vmatpush1.msra.mxu0 %v934
      %961 = vmatprep.subr.mxu0 0.0
      %962 = vmatpush1.msra.mxu0 %v933
      %963 = vmatprep.subr.mxu0 0.0
      %964 = vmatpush1.msra.mxu0 %v932
      %965 = vmatprep.subr.mxu0 0.0
      %966 = vmatpush1.msra.mxu0 %v931
      %967 = vmatprep.subr.mxu0 0.0
      %968 = vmatpush1.msra.mxu0 %v930
      %969 = vmatprep.subr.mxu0 0.0
      %970 = vmatpush1.msra.mxu0 %v929
      %971 = vmatprep.subr.mxu0 0.0
      %972 = vmatpush1.msra.mxu0 %v928
      %973 = vmatprep.subr.mxu0 0.0
      %974 = vmatpush1.msra.mxu0 %v927
      %975 = vmatprep.subr.mxu0 0.0
      %976 = vmatpush2.msra.mxu0 0.0
      %977 = vmatprep.subr.mxu0 0.0
      %978 = vmatpush2.msra.mxu0 0.0
      %979 = vmatprep.subr.mxu0 0.0
      %980 = vmatpush2.msra.mxu0 0.0
      %981 = vmatprep.subr.mxu0 0.0
      %982 = vmatpush2.msra.mxu0 0.0
      %983 = vmatprep.subr.mxu0 0.0
      %984 = vmatpush2.msra.mxu0 0.0
      %985 = vmatprep.subr.mxu0 0.0
      %986 = vmatpush2.msra.mxu0 0.0
      %987 = vmatprep.subr.mxu0 0.0
      %988 = vmatpush2.msra.mxu0 0.0
      %989 = vmatprep.subr.mxu0 0.0
      %990 = vmatpush2.msra.mxu0 0.0
      %991 = vmatprep.subr.mxu0 0.0
      %992 = vmatpush2.msra.mxu0 0.0
      %993 = vmatprep.subr.mxu0 0.0
      %994 = vmatpush2.msra.mxu0 0.0
      %995 = vmatprep.subr.mxu0 0.0
      %996 = vmatpush2.msra.mxu0 0.0
      %997 = vmatprep.subr.mxu0 0.0
      %998 = vmatpush2.msra.mxu0 0.0
      %999 = vmatprep.subr.mxu0 0.0
      %1000 = vmatpush2.msra.mxu0 0.0
      %1001 = vmatprep.subr.mxu0 0.0
      %1002 = vmatpush2.msra.mxu0 0.0
      %1003 = vmatprep.subr.mxu0 0.0
      %1004 = vmatpush2.msra.mxu0 0.0
      %1005 = vmatprep.subr.mxu0 0.0
      %1006 = vmatpush2.msra.mxu0 0.0
      %1007 = vmatprep.mubr.f32.mxu0 0.0
      %1008 = vmatmul.mubr.f32.gmra.mxu0 %v918
      %v1009 = vpop.f32.mrf.mxu0
      %v1010 = vadd.f32 0.0, %v1009
      %v1011 = vpop.f32.mrf.mxu0
      %1012 = vmatprep.mubr.f32.mxu0 0.0
      %1013 = vmatmul.mubr.f32.gmra.mxu0 %v919
      %v1014 = vpop.f32.mrf.mxu0
      %v1015 = vadd.f32 0.0, %v1014
      %v1016 = vpop.f32.mrf.mxu0
      %1017 = vmatprep.mubr.f32.mxu0 0.0
      %1018 = vmatmul.mubr.f32.gmra.mxu0 %v920
      %v1019 = vpop.f32.mrf.mxu0
      %v1020 = vadd.f32 0.0, %v1019
      %v1021 = vpop.f32.mrf.mxu0
      %1022 = vmatprep.mubr.f32.mxu0 0.0
      %1023 = vmatmul.mubr.f32.gmra.mxu0 %v921
      %v1024 = vpop.f32.mrf.mxu0
      %v1025 = vadd.f32 0.0, %v1024
      %v1026 = vpop.f32.mrf.mxu0
      %1027 = vmatprep.mubr.f32.mxu0 0.0
      %1028 = vmatmul.mubr.f32.gmra.mxu0 %v922
      %v1029 = vpop.f32.mrf.mxu0
      %v1030 = vadd.f32 0.0, %v1029
      %v1031 = vpop.f32.mrf.mxu0
      %1032 = vmatprep.mubr.f32.mxu0 0.0
      %1033 = vmatmul.mubr.f32.gmra.mxu0 %v923
      %v1034 = vpop.f32.mrf.mxu0
      %v1035 = vadd.f32 0.0, %v1034
      %v1036 = vpop.f32.mrf.mxu0
      %1037 = vmatprep.mubr.f32.mxu0 0.0
      %1038 = vmatmul.mubr.f32.gmra.mxu0 %v924
      %v1039 = vpop.f32.mrf.mxu0
      %v1040 = vadd.f32 0.0, %v1039
      %v1041 = vpop.f32.mrf.mxu0
      %1042 = vmatprep.mubr.f32.mxu0 0.0
      %1043 = vmatmul.mubr.f32.gmra.mxu0 %v925
      %v1044 = vpop.f32.mrf.mxu0
      %v1045 = vadd.f32 0.0, %v1044
      %v1046 = vpop.f32.mrf.mxu0
      %1047 = vdwg.mxu0
      %v1048 = vadd.f32 %v910, %v1010
      %v1049 = vadd.f32 %v911, %v1015
      %v1050 = vadd.f32 %v912, %v1020
      %v1051 = vadd.f32 %v913, %v1025
      %v1052 = vadd.f32 %v914, %v1030
      %v1053 = vadd.f32 %v915, %v1035
      %v1054 = vadd.f32 %v916, %v1040
      %v1055 = vadd.f32 %v917, %v1045
      %s1056 = scalar_lea.vmem %s230, 16
      %v1057 = vld [vmem:[%s1056] sm:$0xff]
      %v1058 = vld [vmem:[%s1056 + $0x10] sm:$0xff]
      %v1059 = vld [vmem:[%s1056 + $0x20] sm:$0xff]
      %v1060 = vld [vmem:[%s1056 + $0x30] sm:$0xff]
      %v1061 = vld [vmem:[%s1056 + $0x40] sm:$0xff]
      %v1062 = vld [vmem:[%s1056 + $0x50] sm:$0xff]
      %v1063 = vld [vmem:[%s1056 + $0x60] sm:$0xff]
      %v1064 = vld [vmem:[%s1056 + $0x70] sm:$0xff]
      %s1065 = scalar_lea.vmem %s1, 768
      %v1066 = vld [vmem:[%s1065] sm:$0xff]
      %v1067 = vld [vmem:[%s1065 + $0x8] sm:$0xff]
      %v1068 = vld [vmem:[%s1065 + $0x10] sm:$0xff]
      %v1069 = vld [vmem:[%s1065 + $0x18] sm:$0xff]
      %v1070 = vld [vmem:[%s1065 + $0x20] sm:$0xff]
      %v1071 = vld [vmem:[%s1065 + $0x28] sm:$0xff]
      %v1072 = vld [vmem:[%s1065 + $0x30] sm:$0xff]
      %v1073 = vld [vmem:[%s1065 + $0x38] sm:$0xff]
      %v1074 = vld [vmem:[%s1065 + $0x40] sm:$0xff]
      %v1075 = vld [vmem:[%s1065 + $0x48] sm:$0xff]
      %v1076 = vld [vmem:[%s1065 + $0x50] sm:$0xff]
      %v1077 = vld [vmem:[%s1065 + $0x58] sm:$0xff]
      %v1078 = vld [vmem:[%s1065 + $0x60] sm:$0xff]
      %v1079 = vld [vmem:[%s1065 + $0x68] sm:$0xff]
      %v1080 = vld [vmem:[%s1065 + $0x70] sm:$0xff]
      %v1081 = vld [vmem:[%s1065 + $0x78] sm:$0xff]
      %1082 = vmatprep.subr.mxu0 0.0
      %1083 = vmatpush1.msra.mxu0 %v1081
      %1084 = vmatprep.subr.mxu0 0.0
      %1085 = vmatpush1.msra.mxu0 %v1080
      %1086 = vmatprep.subr.mxu0 0.0
      %1087 = vmatpush1.msra.mxu0 %v1079
      %1088 = vmatprep.subr.mxu0 0.0
      %1089 = vmatpush1.msra.mxu0 %v1078
      %1090 = vmatprep.subr.mxu0 0.0
      %1091 = vmatpush1.msra.mxu0 %v1077
      %1092 = vmatprep.subr.mxu0 0.0
      %1093 = vmatpush1.msra.mxu0 %v1076
      %1094 = vmatprep.subr.mxu0 0.0
      %1095 = vmatpush1.msra.mxu0 %v1075
      %1096 = vmatprep.subr.mxu0 0.0
      %1097 = vmatpush1.msra.mxu0 %v1074
      %1098 = vmatprep.subr.mxu0 0.0
      %1099 = vmatpush1.msra.mxu0 %v1073
      %1100 = vmatprep.subr.mxu0 0.0
      %1101 = vmatpush1.msra.mxu0 %v1072
      %1102 = vmatprep.subr.mxu0 0.0
      %1103 = vmatpush1.msra.mxu0 %v1071
      %1104 = vmatprep.subr.mxu0 0.0
      %1105 = vmatpush1.msra.mxu0 %v1070
      %1106 = vmatprep.subr.mxu0 0.0
      %1107 = vmatpush1.msra.mxu0 %v1069
      %1108 = vmatprep.subr.mxu0 0.0
      %1109 = vmatpush1.msra.mxu0 %v1068
      %1110 = vmatprep.subr.mxu0 0.0
      %1111 = vmatpush1.msra.mxu0 %v1067
      %1112 = vmatprep.subr.mxu0 0.0
      %1113 = vmatpush1.msra.mxu0 %v1066
      %1114 = vmatprep.subr.mxu0 0.0
      %1115 = vmatpush2.msra.mxu0 0.0
      %1116 = vmatprep.subr.mxu0 0.0
      %1117 = vmatpush2.msra.mxu0 0.0
      %1118 = vmatprep.subr.mxu0 0.0
      %1119 = vmatpush2.msra.mxu0 0.0
      %1120 = vmatprep.subr.mxu0 0.0
      %1121 = vmatpush2.msra.mxu0 0.0
      %1122 = vmatprep.subr.mxu0 0.0
      %1123 = vmatpush2.msra.mxu0 0.0
      %1124 = vmatprep.subr.mxu0 0.0
      %1125 = vmatpush2.msra.mxu0 0.0
      %1126 = vmatprep.subr.mxu0 0.0
      %1127 = vmatpush2.msra.mxu0 0.0
      %1128 = vmatprep.subr.mxu0 0.0
      %1129 = vmatpush2.msra.mxu0 0.0
      %1130 = vmatprep.subr.mxu0 0.0
      %1131 = vmatpush2.msra.mxu0 0.0
      %1132 = vmatprep.subr.mxu0 0.0
      %1133 = vmatpush2.msra.mxu0 0.0
      %1134 = vmatprep.subr.mxu0 0.0
      %1135 = vmatpush2.msra.mxu0 0.0
      %1136 = vmatprep.subr.mxu0 0.0
      %1137 = vmatpush2.msra.mxu0 0.0
      %1138 = vmatprep.subr.mxu0 0.0
      %1139 = vmatpush2.msra.mxu0 0.0
      %1140 = vmatprep.subr.mxu0 0.0
      %1141 = vmatpush2.msra.mxu0 0.0
      %1142 = vmatprep.subr.mxu0 0.0
      %1143 = vmatpush2.msra.mxu0 0.0
      %1144 = vmatprep.subr.mxu0 0.0
      %1145 = vmatpush2.msra.mxu0 0.0
      %1146 = vmatprep.mubr.f32.mxu0 0.0
      %1147 = vmatmul.mubr.f32.gmra.mxu0 %v1057
      %v1148 = vpop.f32.mrf.mxu0
      %v1149 = vadd.f32 0.0, %v1148
      %v1150 = vpop.f32.mrf.mxu0
      %1151 = vmatprep.mubr.f32.mxu0 0.0
      %1152 = vmatmul.mubr.f32.gmra.mxu0 %v1058
      %v1153 = vpop.f32.mrf.mxu0
      %v1154 = vadd.f32 0.0, %v1153
      %v1155 = vpop.f32.mrf.mxu0
      %1156 = vmatprep.mubr.f32.mxu0 0.0
      %1157 = vmatmul.mubr.f32.gmra.mxu0 %v1059
      %v1158 = vpop.f32.mrf.mxu0
      %v1159 = vadd.f32 0.0, %v1158
      %v1160 = vpop.f32.mrf.mxu0
      %1161 = vmatprep.mubr.f32.mxu0 0.0
      %1162 = vmatmul.mubr.f32.gmra.mxu0 %v1060
      %v1163 = vpop.f32.mrf.mxu0
      %v1164 = vadd.f32 0.0, %v1163
      %v1165 = vpop.f32.mrf.mxu0
      %1166 = vmatprep.mubr.f32.mxu0 0.0
      %1167 = vmatmul.mubr.f32.gmra.mxu0 %v1061
      %v1168 = vpop.f32.mrf.mxu0
      %v1169 = vadd.f32 0.0, %v1168
      %v1170 = vpop.f32.mrf.mxu0
      %1171 = vmatprep.mubr.f32.mxu0 0.0
      %1172 = vmatmul.mubr.f32.gmra.mxu0 %v1062
      %v1173 = vpop.f32.mrf.mxu0
      %v1174 = vadd.f32 0.0, %v1173
      %v1175 = vpop.f32.mrf.mxu0
      %1176 = vmatprep.mubr.f32.mxu0 0.0
      %1177 = vmatmul.mubr.f32.gmra.mxu0 %v1063
      %v1178 = vpop.f32.mrf.mxu0
      %v1179 = vadd.f32 0.0, %v1178
      %v1180 = vpop.f32.mrf.mxu0
      %1181 = vmatprep.mubr.f32.mxu0 0.0
      %1182 = vmatmul.mubr.f32.gmra.mxu0 %v1064
      %v1183 = vpop.f32.mrf.mxu0
      %v1184 = vadd.f32 0.0, %v1183
      %v1185 = vpop.f32.mrf.mxu0
      %1186 = vdwg.mxu0
      %v1187 = vadd.f32 %v1048, %v1149
      %v1188 = vadd.f32 %v1049, %v1154
      %v1189 = vadd.f32 %v1050, %v1159
      %v1190 = vadd.f32 %v1051, %v1164
      %v1191 = vadd.f32 %v1052, %v1169
      %v1192 = vadd.f32 %v1053, %v1174
      %v1193 = vadd.f32 %v1054, %v1179
      %v1194 = vadd.f32 %v1055, %v1184
      %s1195 = scalar_lea.vmem %s230, 160
      %v1196 = vld [vmem:[%s1195] sm:$0xff]
      %v1197 = vld [vmem:[%s1195 + $0x10] sm:$0xff]
      %v1198 = vld [vmem:[%s1195 + $0x20] sm:$0xff]
      %v1199 = vld [vmem:[%s1195 + $0x30] sm:$0xff]
      %v1200 = vld [vmem:[%s1195 + $0x40] sm:$0xff]
      %v1201 = vld [vmem:[%s1195 + $0x50] sm:$0xff]
      %v1202 = vld [vmem:[%s1195 + $0x60] sm:$0xff]
      %v1203 = vld [vmem:[%s1195 + $0x70] sm:$0xff]
      %s1204 = scalar_lea.vmem %s1, 896
      %v1205 = vld [vmem:[%s1204] sm:$0xff]
      %v1206 = vld [vmem:[%s1204 + $0x8] sm:$0xff]
      %v1207 = vld [vmem:[%s1204 + $0x10] sm:$0xff]
      %v1208 = vld [vmem:[%s1204 + $0x18] sm:$0xff]
      %v1209 = vld [vmem:[%s1204 + $0x20] sm:$0xff]
      %v1210 = vld [vmem:[%s1204 + $0x28] sm:$0xff]
      %v1211 = vld [vmem:[%s1204 + $0x30] sm:$0xff]
      %v1212 = vld [vmem:[%s1204 + $0x38] sm:$0xff]
      %v1213 = vld [vmem:[%s1204 + $0x40] sm:$0xff]
      %v1214 = vld [vmem:[%s1204 + $0x48] sm:$0xff]
      %v1215 = vld [vmem:[%s1204 + $0x50] sm:$0xff]
      %v1216 = vld [vmem:[%s1204 + $0x58] sm:$0xff]
      %v1217 = vld [vmem:[%s1204 + $0x60] sm:$0xff]
      %v1218 = vld [vmem:[%s1204 + $0x68] sm:$0xff]
      %v1219 = vld [vmem:[%s1204 + $0x70] sm:$0xff]
      %v1220 = vld [vmem:[%s1204 + $0x78] sm:$0xff]
      %1221 = vmatprep.subr.mxu0 0.0
      %1222 = vmatpush1.msra.mxu0 %v1220
      %1223 = vmatprep.subr.mxu0 0.0
      %1224 = vmatpush1.msra.mxu0 %v1219
      %1225 = vmatprep.subr.mxu0 0.0
      %1226 = vmatpush1.msra.mxu0 %v1218
      %1227 = vmatprep.subr.mxu0 0.0
      %1228 = vmatpush1.msra.mxu0 %v1217
      %1229 = vmatprep.subr.mxu0 0.0
      %1230 = vmatpush1.msra.mxu0 %v1216
      %1231 = vmatprep.subr.mxu0 0.0
      %1232 = vmatpush1.msra.mxu0 %v1215
      %1233 = vmatprep.subr.mxu0 0.0
      %1234 = vmatpush1.msra.mxu0 %v1214
      %1235 = vmatprep.subr.mxu0 0.0
      %1236 = vmatpush1.msra.mxu0 %v1213
      %1237 = vmatprep.subr.mxu0 0.0
      %1238 = vmatpush1.msra.mxu0 %v1212
      %1239 = vmatprep.subr.mxu0 0.0
      %1240 = vmatpush1.msra.mxu0 %v1211
      %1241 = vmatprep.subr.mxu0 0.0
      %1242 = vmatpush1.msra.mxu0 %v1210
      %1243 = vmatprep.subr.mxu0 0.0
      %1244 = vmatpush1.msra.mxu0 %v1209
      %1245 = vmatprep.subr.mxu0 0.0
      %1246 = vmatpush1.msra.mxu0 %v1208
      %1247 = vmatprep.subr.mxu0 0.0
      %1248 = vmatpush1.msra.mxu0 %v1207
      %1249 = vmatprep.subr.mxu0 0.0
      %1250 = vmatpush1.msra.mxu0 %v1206
      %1251 = vmatprep.subr.mxu0 0.0
      %1252 = vmatpush1.msra.mxu0 %v1205
      %1253 = vmatprep.subr.mxu0 0.0
      %1254 = vmatpush2.msra.mxu0 0.0
      %1255 = vmatprep.subr.mxu0 0.0
      %1256 = vmatpush2.msra.mxu0 0.0
      %1257 = vmatprep.subr.mxu0 0.0
      %1258 = vmatpush2.msra.mxu0 0.0
      %1259 = vmatprep.subr.mxu0 0.0
      %1260 = vmatpush2.msra.mxu0 0.0
      %1261 = vmatprep.subr.mxu0 0.0
      %1262 = vmatpush2.msra.mxu0 0.0
      %1263 = vmatprep.subr.mxu0 0.0
      %1264 = vmatpush2.msra.mxu0 0.0
      %1265 = vmatprep.subr.mxu0 0.0
      %1266 = vmatpush2.msra.mxu0 0.0
      %1267 = vmatprep.subr.mxu0 0.0
      %1268 = vmatpush2.msra.mxu0 0.0
      %1269 = vmatprep.subr.mxu0 0.0
      %1270 = vmatpush2.msra.mxu0 0.0
      %1271 = vmatprep.subr.mxu0 0.0
      %1272 = vmatpush2.msra.mxu0 0.0
      %1273 = vmatprep.subr.mxu0 0.0
      %1274 = vmatpush2.msra.mxu0 0.0
      %1275 = vmatprep.subr.mxu0 0.0
      %1276 = vmatpush2.msra.mxu0 0.0
      %1277 = vmatprep.subr.mxu0 0.0
      %1278 = vmatpush2.msra.mxu0 0.0
      %1279 = vmatprep.subr.mxu0 0.0
      %1280 = vmatpush2.msra.mxu0 0.0
      %1281 = vmatprep.subr.mxu0 0.0
      %1282 = vmatpush2.msra.mxu0 0.0
      %1283 = vmatprep.subr.mxu0 0.0
      %1284 = vmatpush2.msra.mxu0 0.0
      %1285 = vmatprep.mubr.f32.mxu0 0.0
      %1286 = vmatmul.mubr.f32.gmra.mxu0 %v1196
      %v1287 = vpop.f32.mrf.mxu0
      %v1288 = vadd.f32 0.0, %v1287
      %v1289 = vpop.f32.mrf.mxu0
      %1290 = vmatprep.mubr.f32.mxu0 0.0
      %1291 = vmatmul.mubr.f32.gmra.mxu0 %v1197
      %v1292 = vpop.f32.mrf.mxu0
      %v1293 = vadd.f32 0.0, %v1292
      %v1294 = vpop.f32.mrf.mxu0
      %1295 = vmatprep.mubr.f32.mxu0 0.0
      %1296 = vmatmul.mubr.f32.gmra.mxu0 %v1198
      %v1297 = vpop.f32.mrf.mxu0
      %v1298 = vadd.f32 0.0, %v1297
      %v1299 = vpop.f32.mrf.mxu0
      %1300 = vmatprep.mubr.f32.mxu0 0.0
      %1301 = vmatmul.mubr.f32.gmra.mxu0 %v1199
      %v1302 = vpop.f32.mrf.mxu0
      %v1303 = vadd.f32 0.0, %v1302
      %v1304 = vpop.f32.mrf.mxu0
      %1305 = vmatprep.mubr.f32.mxu0 0.0
      %1306 = vmatmul.mubr.f32.gmra.mxu0 %v1200
      %v1307 = vpop.f32.mrf.mxu0
      %v1308 = vadd.f32 0.0, %v1307
      %v1309 = vpop.f32.mrf.mxu0
      %1310 = vmatprep.mubr.f32.mxu0 0.0
      %1311 = vmatmul.mubr.f32.gmra.mxu0 %v1201
      %v1312 = vpop.f32.mrf.mxu0
      %v1313 = vadd.f32 0.0, %v1312
      %v1314 = vpop.f32.mrf.mxu0
      %1315 = vmatprep.mubr.f32.mxu0 0.0
      %1316 = vmatmul.mubr.f32.gmra.mxu0 %v1202
      %v1317 = vpop.f32.mrf.mxu0
      %v1318 = vadd.f32 0.0, %v1317
      %v1319 = vpop.f32.mrf.mxu0
      %1320 = vmatprep.mubr.f32.mxu0 0.0
      %1321 = vmatmul.mubr.f32.gmra.mxu0 %v1203
      %v1322 = vpop.f32.mrf.mxu0
      %v1323 = vadd.f32 0.0, %v1322
      %v1324 = vpop.f32.mrf.mxu0
      %1325 = vdwg.mxu0
      %v1326 = vadd.f32 %v1187, %v1288
      %v1327 = vadd.f32 %v1188, %v1293
      %v1328 = vadd.f32 %v1189, %v1298
      %v1329 = vadd.f32 %v1190, %v1303
      %v1330 = vadd.f32 %v1191, %v1308
      %v1331 = vadd.f32 %v1192, %v1313
      %v1332 = vadd.f32 %v1193, %v1318
      %v1333 = vadd.f32 %v1194, %v1323
      %v1334 = vld [vmem:[%s1056 + $0x1] sm:$0xff]
      %v1335 = vld [vmem:[%s1056 + $0x11] sm:$0xff]
      %v1336 = vld [vmem:[%s1056 + $0x21] sm:$0xff]
      %v1337 = vld [vmem:[%s1056 + $0x31] sm:$0xff]
      %v1338 = vld [vmem:[%s1056 + $0x41] sm:$0xff]
      %v1339 = vld [vmem:[%s1056 + $0x51] sm:$0xff]
      %v1340 = vld [vmem:[%s1056 + $0x61] sm:$0xff]
      %v1341 = vld [vmem:[%s1056 + $0x71] sm:$0xff]
      %s1342 = scalar_lea.vmem %s1, 1024
      %v1343 = vld [vmem:[%s1342] sm:$0xff]
      %v1344 = vld [vmem:[%s1342 + $0x8] sm:$0xff]
      %v1345 = vld [vmem:[%s1342 + $0x10] sm:$0xff]
      %v1346 = vld [vmem:[%s1342 + $0x18] sm:$0xff]
      %v1347 = vld [vmem:[%s1342 + $0x20] sm:$0xff]
      %v1348 = vld [vmem:[%s1342 + $0x28] sm:$0xff]
      %v1349 = vld [vmem:[%s1342 + $0x30] sm:$0xff]
      %v1350 = vld [vmem:[%s1342 + $0x38] sm:$0xff]
      %v1351 = vld [vmem:[%s1342 + $0x40] sm:$0xff]
      %v1352 = vld [vmem:[%s1342 + $0x48] sm:$0xff]
      %v1353 = vld [vmem:[%s1342 + $0x50] sm:$0xff]
      %v1354 = vld [vmem:[%s1342 + $0x58] sm:$0xff]
      %v1355 = vld [vmem:[%s1342 + $0x60] sm:$0xff]
      %v1356 = vld [vmem:[%s1342 + $0x68] sm:$0xff]
      %v1357 = vld [vmem:[%s1342 + $0x70] sm:$0xff]
      %v1358 = vld [vmem:[%s1342 + $0x78] sm:$0xff]
      %1359 = vmatprep.subr.mxu0 0.0
      %1360 = vmatpush1.msra.mxu0 %v1358
      %1361 = vmatprep.subr.mxu0 0.0
      %1362 = vmatpush1.msra.mxu0 %v1357
      %1363 = vmatprep.subr.mxu0 0.0
      %1364 = vmatpush1.msra.mxu0 %v1356
      %1365 = vmatprep.subr.mxu0 0.0
      %1366 = vmatpush1.msra.mxu0 %v1355
      %1367 = vmatprep.subr.mxu0 0.0
      %1368 = vmatpush1.msra.mxu0 %v1354
      %1369 = vmatprep.subr.mxu0 0.0
      %1370 = vmatpush1.msra.mxu0 %v1353
      %1371 = vmatprep.subr.mxu0 0.0
      %1372 = vmatpush1.msra.mxu0 %v1352
      %1373 = vmatprep.subr.mxu0 0.0
      %1374 = vmatpush1.msra.mxu0 %v1351
      %1375 = vmatprep.subr.mxu0 0.0
      %1376 = vmatpush1.msra.mxu0 %v1350
      %1377 = vmatprep.subr.mxu0 0.0
      %1378 = vmatpush1.msra.mxu0 %v1349
      %1379 = vmatprep.subr.mxu0 0.0
      %1380 = vmatpush1.msra.mxu0 %v1348
      %1381 = vmatprep.subr.mxu0 0.0
      %1382 = vmatpush1.msra.mxu0 %v1347
      %1383 = vmatprep.subr.mxu0 0.0
      %1384 = vmatpush1.msra.mxu0 %v1346
      %1385 = vmatprep.subr.mxu0 0.0
      %1386 = vmatpush1.msra.mxu0 %v1345
      %1387 = vmatprep.subr.mxu0 0.0
      %1388 = vmatpush1.msra.mxu0 %v1344
      %1389 = vmatprep.subr.mxu0 0.0
      %1390 = vmatpush1.msra.mxu0 %v1343
      %1391 = vmatprep.subr.mxu0 0.0
      %1392 = vmatpush2.msra.mxu0 0.0
      %1393 = vmatprep.subr.mxu0 0.0
      %1394 = vmatpush2.msra.mxu0 0.0
      %1395 = vmatprep.subr.mxu0 0.0
      %1396 = vmatpush2.msra.mxu0 0.0
      %1397 = vmatprep.subr.mxu0 0.0
      %1398 = vmatpush2.msra.mxu0 0.0
      %1399 = vmatprep.subr.mxu0 0.0
      %1400 = vmatpush2.msra.mxu0 0.0
      %1401 = vmatprep.subr.mxu0 0.0
      %1402 = vmatpush2.msra.mxu0 0.0
      %1403 = vmatprep.subr.mxu0 0.0
      %1404 = vmatpush2.msra.mxu0 0.0
      %1405 = vmatprep.subr.mxu0 0.0
      %1406 = vmatpush2.msra.mxu0 0.0
      %1407 = vmatprep.subr.mxu0 0.0
      %1408 = vmatpush2.msra.mxu0 0.0
      %1409 = vmatprep.subr.mxu0 0.0
      %1410 = vmatpush2.msra.mxu0 0.0
      %1411 = vmatprep.subr.mxu0 0.0
      %1412 = vmatpush2.msra.mxu0 0.0
      %1413 = vmatprep.subr.mxu0 0.0
      %1414 = vmatpush2.msra.mxu0 0.0
      %1415 = vmatprep.subr.mxu0 0.0
      %1416 = vmatpush2.msra.mxu0 0.0
      %1417 = vmatprep.subr.mxu0 0.0
      %1418 = vmatpush2.msra.mxu0 0.0
      %1419 = vmatprep.subr.mxu0 0.0
      %1420 = vmatpush2.msra.mxu0 0.0
      %1421 = vmatprep.subr.mxu0 0.0
      %1422 = vmatpush2.msra.mxu0 0.0
      %1423 = vmatprep.mubr.f32.mxu0 0.0
      %1424 = vmatmul.mubr.f32.gmra.mxu0 %v1334
      %v1425 = vpop.f32.mrf.mxu0
      %v1426 = vadd.f32 0.0, %v1425
      %v1427 = vpop.f32.mrf.mxu0
      %1428 = vmatprep.mubr.f32.mxu0 0.0
      %1429 = vmatmul.mubr.f32.gmra.mxu0 %v1335
      %v1430 = vpop.f32.mrf.mxu0
      %v1431 = vadd.f32 0.0, %v1430
      %v1432 = vpop.f32.mrf.mxu0
      %1433 = vmatprep.mubr.f32.mxu0 0.0
      %1434 = vmatmul.mubr.f32.gmra.mxu0 %v1336
      %v1435 = vpop.f32.mrf.mxu0
      %v1436 = vadd.f32 0.0, %v1435
      %v1437 = vpop.f32.mrf.mxu0
      %1438 = vmatprep.mubr.f32.mxu0 0.0
      %1439 = vmatmul.mubr.f32.gmra.mxu0 %v1337
      %v1440 = vpop.f32.mrf.mxu0
      %v1441 = vadd.f32 0.0, %v1440
      %v1442 = vpop.f32.mrf.mxu0
      %1443 = vmatprep.mubr.f32.mxu0 0.0
      %1444 = vmatmul.mubr.f32.gmra.mxu0 %v1338
      %v1445 = vpop.f32.mrf.mxu0
      %v1446 = vadd.f32 0.0, %v1445
      %v1447 = vpop.f32.mrf.mxu0
      %1448 = vmatprep.mubr.f32.mxu0 0.0
      %1449 = vmatmul.mubr.f32.gmra.mxu0 %v1339
      %v1450 = vpop.f32.mrf.mxu0
      %v1451 = vadd.f32 0.0, %v1450
      %v1452 = vpop.f32.mrf.mxu0
      %1453 = vmatprep.mubr.f32.mxu0 0.0
      %1454 = vmatmul.mubr.f32.gmra.mxu0 %v1340
      %v1455 = vpop.f32.mrf.mxu0
      %v1456 = vadd.f32 0.0, %v1455
      %v1457 = vpop.f32.mrf.mxu0
      %1458 = vmatprep.mubr.f32.mxu0 0.0
      %1459 = vmatmul.mubr.f32.gmra.mxu0 %v1341
      %v1460 = vpop.f32.mrf.mxu0
      %v1461 = vadd.f32 0.0, %v1460
      %v1462 = vpop.f32.mrf.mxu0
      %1463 = vdwg.mxu0
      %v1464 = vadd.f32 %v1326, %v1426
      %v1465 = vadd.f32 %v1327, %v1431
      %v1466 = vadd.f32 %v1328, %v1436
      %v1467 = vadd.f32 %v1329, %v1441
      %v1468 = vadd.f32 %v1330, %v1446
      %v1469 = vadd.f32 %v1331, %v1451
      %v1470 = vadd.f32 %v1332, %v1456
      %v1471 = vadd.f32 %v1333, %v1461
      %v1472 = vld [vmem:[%s2] sm:$0x1]
      %v1474 = vlaneseq
      %v1475 = vshrl.u32 %v1474, 7
      %v1476 = vsub.s32 0, %v1475
      %v1477 = vrot.slane %v1472, %v1476
      %v1479 = vadd.f32 %v1464, %v1477
      %v1480 = vadd.f32 %v1465, %v1477
      %v1481 = vadd.f32 %v1466, %v1477
      %v1482 = vadd.f32 %v1467, %v1477
      %v1483 = vadd.f32 %v1468, %v1477
      %v1484 = vadd.f32 %v1469, %v1477
      %v1485 = vadd.f32 %v1470, %v1477
      %v1486 = vadd.f32 %v1471, %v1477
      %1487 = vst [vmem:[%s235] sm:$0xff] %v1479
      %1488 = vst [vmem:[%s235 + $0x8] sm:$0xff] %v1480
      %1489 = vst [vmem:[%s235 + $0x10] sm:$0xff] %v1481
      %1490 = vst [vmem:[%s235 + $0x18] sm:$0xff] %v1482
      %1491 = vst [vmem:[%s235 + $0x20] sm:$0xff] %v1483
      %1492 = vst [vmem:[%s235 + $0x28] sm:$0xff] %v1484
      %1493 = vst [vmem:[%s235 + $0x30] sm:$0xff] %v1485
      %1494 = vst [vmem:[%s235 + $0x38] sm:$0xff] %v1486
      %v1495 = vadd.f32 %v1479, %v1480
      %v1496 = vadd.f32 %v1495, %v1481
      %v1497 = vadd.f32 %v1496, %v1482
      %v1498 = vadd.f32 %v1497, %v1483
      %v1499 = vadd.f32 %v1498, %v1484
      %v1500 = vadd.f32 %v1499, %v1485
      %v1501 = vadd.f32 %v1500, %v1486
      %v1502 = vrot.slane %v1501, 4
      %v1503 = vadd.f32 %v1501, %v1502
      %v1504 = vrot.slane %v1503, 2
      %v1505 = vadd.f32 %v1503, %v1504
      %v1506 = vrot.slane %v1505, 1
      %v1507 = vadd.f32 %v1505, %v1506
      %1508 = vst [vmem:[%s238] sm:$0x1] %v1507
      %v1509 = vmul.f32 %v1479, %v1479
      %v1510 = vmul.f32 %v1480, %v1480
      %v1511 = vmul.f32 %v1481, %v1481
      %v1512 = vmul.f32 %v1482, %v1482
      %v1513 = vmul.f32 %v1483, %v1483
      %v1514 = vmul.f32 %v1484, %v1484
      %v1515 = vmul.f32 %v1485, %v1485
      %v1516 = vmul.f32 %v1486, %v1486
      %v1517 = vadd.f32 %v1509, %v1510
      %v1518 = vadd.f32 %v1517, %v1511
      %v1519 = vadd.f32 %v1518, %v1512
      %v1520 = vadd.f32 %v1519, %v1513
      %v1521 = vadd.f32 %v1520, %v1514
      %v1522 = vadd.f32 %v1521, %v1515
      %v1523 = vadd.f32 %v1522, %v1516
      %v1524 = vrot.slane %v1523, 4
      %v1525 = vadd.f32 %v1523, %v1524
      %v1526 = vrot.slane %v1525, 2
      %v1527 = vadd.f32 %v1525, %v1526
      %v1528 = vrot.slane %v1527, 1
      %v1529 = vadd.f32 %v1527, %v1528
      %1530 = vst [vmem:[%s241] sm:$0x1] %v1529
      %p1531 = scmp.lt.s32.totalorder %s17, 1
      %s1532 = scalar_select %p1531, %s17, 1
      %s1533 = smul.addr %s1532, 8
      %s1534 = smul.addr %s1533, 8
      %s1535 = scalar_lea.vmem %s3, %s1534
      %p1536 = scmp.lt.s32.totalorder %s17, 1
      %s1537 = scalar_select %p1536, %s17, 1
      %s1538 = scalar_lea.vmem %s4, %s1537
      %p1539 = scmp.lt.s32.totalorder %s17, 1
      %s1540 = scalar_select %p1539, %s17, 1
      %s1541 = scalar_lea.vmem %s5, %s1540
      // Predicated region
      $region33: #{group8_forward.2} parent=31 // pred_check
        %p1542 = pneg %p103
      $region34: #{group8_forward.2} parent=31 // pred_check_branch
        %1544 = sbr.rel (%p1542) target = $region36
      $region35: #{group8_forward.2} parent=31 // pred_region
        _
      $region36: #{group8_forward.2} parent=31 // pred_fallthru
        _
      // Predicated region
      $region37: #{group8_forward.2} parent=31 // pred_check
        %p1545 = pneg %p129
      $region38: #{group8_forward.2} parent=31 // pred_check_branch
        %1547 = sbr.rel (%p1545) target = $region40
      $region39: #{group8_forward.2} parent=31 // pred_region
        _
      $region40: #{group8_forward.2} parent=31 // pred_fallthru
        _
      // Predicated region
      $region41: #{group8_forward.2} parent=31 // pred_check
        %p1548 = pneg %p155
      $region42: #{group8_forward.2} parent=31 // pred_check_branch
        %1550 = sbr.rel (%p1548) target = $region44
      $region43: #{group8_forward.2} parent=31 // pred_region
        _
      $region44: #{group8_forward.2} parent=31 // pred_fallthru
        _
    $region32: #{group8_forward.2} parent=5 // pred_fallthru
      _
    %p1551 = scmp.le.s32.totalorder 2, %s12
    // Predicated region
    $region45: #{group8_forward.2} parent=5 // pred_check
      %p1552 = pneg %p1551
    $region46: #{group8_forward.2} parent=5 // pred_check_branch
      %1554 = sbr.rel (%p1552) target = $region48
    $region47: #{group8_forward.2} parent=5 // pred_region
      %s1555 = ssub.s32 %s12, 2
      // Predicated region
      $region49: #{group8_forward.2} parent=47 // pred_check
        %p1556 = pneg %p109
      $region50: #{group8_forward.2} parent=47 // pred_check_branch
        %1558 = sbr.rel (%p1556) target = $region52
      $region51: #{group8_forward.2} parent=47 // pred_region
        %p1559 = scmp.lt.s32.totalorder %s18, 1
        %s1560 = scalar_select %p1559, %s18, 1
        %s1561 = smul.addr %s1560, 8
        %s1562 = smul.addr %s1561, 8
        %s1563 = scalar_lea.vmem %s3, %s1562
      $region52: #{group8_forward.2} parent=47 // pred_fallthru
        _
      // Predicated region
      $region53: #{group8_forward.2} parent=47 // pred_check
        %p1564 = pneg %p135
      $region54: #{group8_forward.2} parent=47 // pred_check_branch
        %1566 = sbr.rel (%p1564) target = $region56
      $region55: #{group8_forward.2} parent=47 // pred_region
        %p1567 = scmp.lt.s32.totalorder %s18, 1
        %s1568 = scalar_select %p1567, %s18, 1
        %s1569 = scalar_lea.vmem %s4, %s1568
      $region56: #{group8_forward.2} parent=47 // pred_fallthru
        _
      // Predicated region
      $region57: #{group8_forward.2} parent=47 // pred_check
        %p1570 = pneg %p161
      $region58: #{group8_forward.2} parent=47 // pred_check_branch
        %1572 = sbr.rel (%p1570) target = $region60
      $region59: #{group8_forward.2} parent=47 // pred_region
        %p1573 = scmp.lt.s32.totalorder %s18, 1
        %s1574 = scalar_select %p1573, %s18, 1
        %s1575 = scalar_lea.vmem %s5, %s1574
      $region60: #{group8_forward.2} parent=47 // pred_fallthru
        _
    $region48: #{group8_forward.2} parent=5 // pred_fallthru
      _
  $region6: #{group8_forward.2} parent=0 // loop_footer
    %s16 = sadd.s32 1, %s12
  $region7: #{group8_forward.2} parent=0 // loop_footer_branch
    %11 = sbr.rel target = $region3
  $region8: #{group8_forward.2} parent=0 // loop_exit
    _

</llo_original>
